<compile_context>
chip_gen: v5e
topology: v5e:2x2
jax: 0.10.0
libtpu: 0.0.40
codegen_flags: <defaults>
</compile_context>

<pallas_src>
import math
from functools import partial

import jax
import jax.numpy as jnp
from jax import lax
from jax.experimental import pallas as pl
from jax.experimental.pallas import tpu as pltpu

_LOG2E = 1.4426950408889634


# ------------------------ per-generation defaults (best effort) --------------------------

def _tpu_defaults():
    """Pick a block-size target and scoped-VMEM cap for the current TPU generation."""
    vmem_limit = 32 * 1024 * 1024                       # conservative: fits every generation
    try:
        cap = int(getattr(pltpu.get_tpu_info(), "vmem_capacity_bytes", 0))
        if cap > 0:
            # ~48 MiB on v7x (64 MiB VMEM), ~96 MiB on v5e/v6e (128 MiB VMEM).
            vmem_limit = min((cap * 3) // 4, 100 * 1024 * 1024)
    except Exception:
        pass
    block_target = 128                                  # v5e (4x128^2 MXU) / v7x (64 MiB VMEM)
    try:
        if "v6" in jax.devices()[0].device_kind.lower():
            block_target = 256                          # v6e: 256-wide MXU + 128 MiB VMEM
    except Exception:
        pass
    return block_target, vmem_limit


# ----------------------------- stage 1: fused QKV projection -----------------------------

def _qkv_proj_kernel(x_ref, wq_ref, wk_ref, wv_ref, q_ref, k_ref, v_ref, *,
                     group, head_dim, mxu_dtype):
    # Grid: (batch, kv_head, q_block).  Per step: project one x tile onto the weight
    # columns of one kv-head group and store each head directly into its (head, seq)
    # slot.  No (seq, heads, d) transpose anywhere; only static lane slices.
    x = x_ref[0].astype(mxu_dtype)                                     # (TQ, H)
    q = jnp.dot(x, wq_ref[0], preferred_element_type=jnp.float32)      # (TQ, group*d)
    k = jnp.dot(x, wk_ref[0], preferred_element_type=jnp.float32)      # (TQ, d)
    v = jnp.dot(x, wv_ref[0], preferred_element_type=jnp.float32)      # (TQ, d)
    for g in range(group):
        q_ref[0, g] = q[:, g * head_dim:(g + 1) * head_dim].astype(q_ref.dtype)
    k_ref[0, 0] = k.astype(k_ref.dtype)
    v_ref[0, 0] = v.astype(v_ref.dtype)


# --------------------- stage 2: causal flash attention + fused o_proj --------------------

def _flash_attn_kernel(qi_ref, ki_ref, q_ref, k_ref, v_ref, wo_ref, bo_ref, o_ref,
                       m_ref, l_ref, acc_ref, *,
                       num_heads, num_kv_heads, head_dim, block_q, block_k,
                       mxu_dtype, exact):
    group = num_heads // num_kv_heads
    t = pl.program_id(1)
    qi = qi_ref[t]                       # flattened lower-triangular enumeration:
    ki = ki_ref[t]                       # for each qi, ki = 0..qi (diagonal last).
    is_diag = ki == qi

    NEG_BIG = jnp.float32(-1e30)         # finite "-inf": no NaN risk on masked rows

    @pl.when(ki == 0)
    def _init():
        m_ref[...] = jnp.full(m_ref.shape, NEG_BIG, dtype=m_ref.dtype)
        l_ref[...] = jnp.zeros(l_ref.shape, dtype=l_ref.dtype)
        acc_ref[...] = jnp.zeros(acc_ref.shape, dtype=acc_ref.dtype)

    # Q already carries sm_scale * log2(e) (folded into Wq host-side), so scores live in
    # the log2 domain and the softmax uses exp2 (no per-element scale multiply).
    # GQA: reshape Q to (nKV, group*TQ, d) instead of repeating K/V -- no extra copies,
    # and the MXU sees an M dimension of group*TQ.
    q = q_ref[0].reshape(num_kv_heads, group * block_q, head_dim)
    k = k_ref[0]                                                     # (nKV, TK, d)
    v = v_ref[0]                                                     # (nKV, TK, d)
    s = jnp.einsum('gqd,gkd->gqk', q, k,
                   preferred_element_type=jnp.float32)               # (nKV, g*TQ, TK) f32

    def update(scores):
        m_prev = m_ref[...]                                          # (nKV, g*TQ, 1)
        m_new = jnp.maximum(m_prev, jnp.max(scores, axis=-1, keepdims=True))
        alpha = jnp.exp2(m_prev - m_new)
        p = jnp.exp2(scores - m_new)                                 # EUP
        l_ref[...] = alpha * l_ref[...] + jnp.sum(p, axis=-1, keepdims=True)
        pv = jnp.einsum('gqk,gkd->gqd', p.astype(mxu_dtype), v,
                        preferred_element_type=jnp.float32)
        acc_ref[...] = alpha * acc_ref[...] + pv
        m_ref[...] = m_new

    @pl.when(jnp.logical_not(is_diag))   # fully-visible block: no mask work at all
    def _():
        update(s)

    @pl.when(is_diag)                    # diagonal block: local lower-triangular mask only
    def _():
        rows = lax.broadcasted_iota(jnp.int32, (block_q, block_k), 0)
        cols = lax.broadcasted_iota(jnp.int32, (block_q, block_k), 1)
        s4 = s.reshape(num_kv_heads, group, block_q, block_k)
        masked = jnp.where(rows >= cols, s4, NEG_BIG)
        update(masked.reshape(num_kv_heads, group * block_q, block_k))

    # The diagonal block is the last KV block of this q-row: normalize once, apply the
    # fused o_proj and write the lane-dense (TQ, H) output slab.
    @pl.when(is_diag)
    def _finalize():
        recip = pl.reciprocal(l_ref[...], approx=not exact)          # (nKV, g*TQ, 1)
        attn = (acc_ref[...] * recip).reshape(num_heads, block_q, head_dim)
        attn = attn.astype(mxu_dtype)
        out = bo_ref[...].astype(jnp.float32)                        # (1, H) -> broadcasts
        # Per-head (TQ,d)@(d,H) matmuls accumulate straight into the (TQ,H) slab: no
        # (nH,TQ,d)->(TQ,nH*d) XLU relayout on the critical path before the o_proj.
        for h in range(num_heads):
            out = out + jnp.dot(attn[h], wo_ref[h],
                                preferred_element_type=jnp.float32)
        o_ref[0] = out.astype(o_ref.dtype)


# ------------------------------------- wrapper -------------------------------------------

def _attention_forward(x, wq, wk, wv, wo, bo, *, num_heads, num_kv_heads,
                       block_q, block_k, mxu_dtype, single_buffer_weights):
    B, S, H = x.shape
    assert H % num_heads == 0 and num_heads % num_kv_heads == 0
    head_dim = H // num_heads
    group = num_heads // num_kv_heads
    kv_dim = num_kv_heads * head_dim

    if mxu_dtype is None:
        mxu_dtype = x.dtype
    mxu_dtype = jnp.dtype(mxu_dtype)
    exact = mxu_dtype == jnp.dtype(jnp.float32)
    itemsize = mxu_dtype.itemsize

    block_target, vmem_limit = _tpu_defaults()
    if block_q is None:
        block_q = min(S, block_target)
        while block_q > 8 and S % block_q != 0:
            block_q //= 2
    block_k = block_q if block_k is None else block_k
    assert block_q == block_k, "causal diagonal-finalize assumes square blocks"
    assert S % block_q == 0
    assert block_q == S or block_q % 8 == 0
    nq = S // block_q

    # --- host-side weight relayout (one-time glue, outside the kernels) -----------------
    #  * sm_scale * log2(e) folded into Wq -> stage-2 softmax runs in the exp2 domain.
    #  * Projection weights pre-split per kv-head group so every stage-1 block covers its
    #    full trailing dims and only a slice is resident per step.
    #  * Wo pre-reshaped to (nH, d, H) for the transpose-free fused o_proj.
    sm_scale = 1.0 / math.sqrt(head_dim)
    wq3 = (wq.T * (sm_scale * _LOG2E)).reshape(H, num_kv_heads, group * head_dim)
    wq3 = wq3.transpose(1, 0, 2).astype(mxu_dtype)                  # (nKV, H, group*d)
    wk3 = wk.T.reshape(H, num_kv_heads, head_dim).transpose(1, 0, 2).astype(mxu_dtype)
    wv3 = wv.T.reshape(H, num_kv_heads, head_dim).transpose(1, 0, 2).astype(mxu_dtype)
    wo3 = wo.T.reshape(num_heads, head_dim, H).astype(mxu_dtype)    # (nH, d, H)
    bo2 = bo.reshape(1, H).astype(jnp.float32)

    # TODO(synk): for very large H on v7x (64 MiB VMEM), additionally tile Wo over its
    # output columns (separate column-tiled o_proj pass) instead of keeping it resident.
    # TODO(synk): for head_dim < 128 the QKV handoff stores/loads are lane-masked; packing
    # two heads per 128-lane block would make them lane-dense.

    # ---- stage 1: q/k/v projections, heads-major outputs, per-kv-group weight slices ----
    q, k, v = pl.pallas_call(
        partial(_qkv_proj_kernel, group=group, head_dim=head_dim, mxu_dtype=mxu_dtype),
        grid=(B, num_kv_heads, nq),
        in_specs=[
            pl.BlockSpec((1, block_q, H), lambda b, h, i: (b, i, 0)),            # x tile
            pl.BlockSpec((1, H, group * head_dim), lambda b, h, i: (h, 0, 0)),   # Wq slice
            pl.BlockSpec((1, H, head_dim), lambda b, h, i: (h, 0, 0)),           # Wk slice
            pl.BlockSpec((1, H, head_dim), lambda b, h, i: (h, 0, 0)),           # Wv slice
        ],
        out_specs=[
            pl.BlockSpec((1, group, block_q, head_dim), lambda b, h, i: (b, h, i, 0)),
            pl.BlockSpec((1, 1, block_q, head_dim), lambda b, h, i: (b, h, i, 0)),
            pl.BlockSpec((1, 1, block_q, head_dim), lambda b, h, i: (b, h, i, 0)),
        ],
        out_shape=[
            jax.ShapeDtypeStruct((B, num_heads, S, head_dim), mxu_dtype),
            jax.ShapeDtypeStruct((B, num_kv_heads, S, head_dim), mxu_dtype),
            jax.ShapeDtypeStruct((B, num_kv_heads, S, head_dim), mxu_dtype),
        ],
        compiler_params=pltpu.CompilerParams(
            dimension_semantics=("parallel", "parallel", "parallel"),
            vmem_limit_bytes=vmem_limit),
        cost_estimate=pl.CostEstimate(
            flops=2 * B * S * H * (H + 2 * kv_dim),
            transcendentals=0,
            bytes_accessed=int(B * num_kv_heads * S * H * x.dtype.itemsize
                               + B * H * (H + 2 * kv_dim) * itemsize
                               + B * S * (H + 2 * kv_dim) * itemsize)),
    )(x, wq3, wk3, wv3)

    # ---- stage 2: flash attention over the flattened lower-triangular block grid --------
    tri = [(i, j) for i in range(nq) for j in range(i + 1)]   # ki ascending, diagonal last
    n_tri = len(tri)
    qi_map = jnp.asarray([p[0] for p in tri], dtype=jnp.int32)
    ki_map = jnp.asarray([p[1] for p in tri], dtype=jnp.int32)

    def _const_spec(shape, index_map):
        # Grid-invariant operand: keep one resident copy instead of the default 2 buffers.
        if single_buffer_weights and hasattr(pl, "Buffered"):
            return pl.BlockSpec(shape, index_map, pipeline_mode=pl.Buffered(1))
        return pl.BlockSpec(shape, index_map)

    grid_spec = pltpu.PrefetchScalarGridSpec(
        num_scalar_prefetch=2,
        grid=(B, n_tri),
        in_specs=[
            pl.BlockSpec((1, num_heads, block_q, head_dim),
                         lambda b, t, qi, ki: (b, 0, qi[t], 0)),
            pl.BlockSpec((1, num_kv_heads, block_k, head_dim),
                         lambda b, t, qi, ki: (b, 0, ki[t], 0)),
            pl.BlockSpec((1, num_kv_heads, block_k, head_dim),
                         lambda b, t, qi, ki: (b, 0, ki[t], 0)),
            _const_spec((num_heads, head_dim, H), lambda b, t, qi, ki: (0, 0, 0)),
            _const_spec((1, H), lambda b, t, qi, ki: (0, 0)),
        ],
        out_specs=pl.BlockSpec((1, block_q, H), lambda b, t, qi, ki: (b, qi[t], 0)),
        scratch_shapes=[
            pltpu.VMEM((num_kv_heads, group * block_q, 1), jnp.float32),          # m
            pltpu.VMEM((num_kv_heads, group * block_q, 1), jnp.float32),          # l
            pltpu.VMEM((num_kv_heads, group * block_q, head_dim), jnp.float32),   # acc
        ],
    )

    kernel = partial(_flash_attn_kernel, num_heads=num_heads, num_kv_heads=num_kv_heads,
                     head_dim=head_dim, block_q=block_q, block_k=block_k,
                     mxu_dtype=mxu_dtype, exact=exact)

    attn_mm_flops = 4 * B * n_tri * num_heads * block_q * block_k * head_dim
    out = pl.pallas_call(
        kernel,
        grid_spec=grid_spec,
        out_shape=jax.ShapeDtypeStruct((B, S, H), x.dtype),
        compiler_params=pltpu.CompilerParams(
            dimension_semantics=("parallel", "arbitrary"),
            vmem_limit_bytes=vmem_limit),
        cost_estimate=pl.CostEstimate(
            flops=attn_mm_flops + 2 * B * S * H * H,
            transcendentals=B * n_tri * num_heads * block_q * block_k,
            bytes_accessed=int(B * S * H * itemsize
                               + 2 * B * n_tri * num_kv_heads * block_k * head_dim * itemsize
                               + H * H * itemsize
                               + B * S * H * x.dtype.itemsize)),
    )(qi_map, ki_map, q, k, v, wo3, bo2)
    return out


def attention_forward(x, wq, wk, wv, wo, bo, *, num_heads, num_kv_heads,
                      block_q=None, block_k=None, mxu_dtype=None):
    """x: (B, S, H); wq/wk/wv/wo: PyTorch-convention (out, in) weights; bo: (H,)."""
    try:
        return _attention_forward(x, wq, wk, wv, wo, bo,
                                  num_heads=num_heads, num_kv_heads=num_kv_heads,
                                  block_q=block_q, block_k=block_k, mxu_dtype=mxu_dtype,
                                  single_buffer_weights=True)
    except Exception:
        # pl.Buffered(1) single-buffering unsupported on this jax build: retry with the
        # default double-buffered (identical math, just more weight VMEM).
        return _attention_forward(x, wq, wk, wv, wo, bo,
                                  num_heads=num_heads, num_kv_heads=num_kv_heads,
                                  block_q=block_q, block_k=block_k, mxu_dtype=mxu_dtype,
                                  single_buffer_weights=False)


# --------------------------------- pure-JAX reference ------------------------------------

def reference_attention(x, wq, wk, wv, wo, bo, num_heads, num_kv_heads):
    """Mirrors the PyTorch forward (causal SDPA, attention_mask=None)."""
    B, S, H = x.shape
    d = H // num_heads
    q = (x @ wq.T).reshape(B, S, num_heads, d).transpose(0, 2, 1, 3)
    k = (x @ wk.T).reshape(B, S, num_kv_heads, d).transpose(0, 2, 1, 3)
    v = (x @ wv.T).reshape(B, S, num_kv_heads, d).transpose(0, 2, 1, 3)
    rep = num_heads // num_kv_heads
    k = jnp.repeat(k, rep, axis=1)
    v = jnp.repeat(v, rep, axis=1)
    s = jnp.einsum('bhqd,bhkd->bhqk', q, k) / math.sqrt(d)
    mask = jnp.tril(jnp.ones((S, S), dtype=bool))
    s = jnp.where(mask, s, -jnp.inf)
    p = jax.nn.softmax(s, axis=-1)
    o = jnp.einsum('bhqk,bhkd->bhqd', p, v)
    o = o.transpose(0, 2, 1, 3).reshape(B, S, H)
    return o @ wo.T + bo


if __name__ == "__main__":
    def run_case(B, S, H, num_heads, num_kv_heads, block_q):
        head_dim = H // num_heads
        kv_dim = num_kv_heads * head_dim
        key = jax.random.PRNGKey(0)
        kx, kq, kk, kv_, ko, kb = jax.random.split(key, 6)
        x = jax.random.normal(kx, (B, S, H), dtype=jnp.float32)
        wq = jax.random.normal(kq, (H, H), dtype=jnp.float32) * 0.05
        wk = jax.random.normal(kk, (kv_dim, H), dtype=jnp.float32) * 0.05
        wv = jax.random.normal(kv_, (kv_dim, H), dtype=jnp.float32) * 0.05
        wo = jax.random.normal(ko, (H, H), dtype=jnp.float32) * 0.05
        bo = jax.random.normal(kb, (H,), dtype=jnp.float32) * 0.05

        ref = reference_attention(x, wq, wk, wv, wo, bo, num_heads, num_kv_heads)

        out_fp32 = jax.block_until_ready(attention_forward(
            x, wq, wk, wv, wo, bo, num_heads=num_heads, num_kv_heads=num_kv_heads,
            block_q=block_q, mxu_dtype=jnp.float32))
        assert out_fp32.shape == (B, S, H)
        assert jnp.allclose(out_fp32, ref, atol=2e-3, rtol=2e-3), "fp32 path mismatch"

        out_bf16 = jax.block_until_ready(attention_forward(
            x, wq, wk, wv, wo, bo, num_heads=num_heads, num_kv_heads=num_kv_heads,
            block_q=block_q, mxu_dtype=jnp.bfloat16))
        assert out_bf16.shape == (B, S, H)
        assert jnp.allclose(out_bf16, ref, atol=3e-2, rtol=3e-2), "bf16 path mismatch"

    # MHA: hidden=32, 4 heads (head_dim=8); seq=16 with 8-row blocks so the flattened
    # lower-triangular KV grid (3 block pairs per batch) is actually exercised.
    run_case(B=2, S=16, H=32, num_heads=4, num_kv_heads=4, block_q=8)
    # GQA: num_key_value_heads=2 (group=2) exercises the kv-grouped score path and the
    # per-group head-slot stores in stage 1.
    run_case(B=2, S=16, H=32, num_heads=4, num_kv_heads=2, block_q=8)
    print("KERNEL_OK")
</pallas_src>

<mosaic_0001>
module attributes {stable_mosaic.version = 11 : i64} {
  func.func @_qkv_proj_kernel(%arg0: i32, %arg1: i32, %arg2: i32, %arg3: memref<1x8x32xf32, #tpu.memory_space<vmem>>, %arg4: memref<1x32x8xf32, #tpu.memory_space<vmem>>, %arg5: memref<1x32x8xf32, #tpu.memory_space<vmem>>, %arg6: memref<1x32x8xf32, #tpu.memory_space<vmem>>, %arg7: memref<1x1x8x8xf32, #tpu.memory_space<vmem>>, %arg8: memref<1x1x8x8xf32, #tpu.memory_space<vmem>>, %arg9: memref<1x1x8x8xf32, #tpu.memory_space<vmem>>) attributes {dimension_semantics = [#tpu.dimension_semantics<parallel>, #tpu.dimension_semantics<parallel>, #tpu.dimension_semantics<parallel>], iteration_bounds = array<i64: 2, 4, 2>, scalar_prefetch = 0 : i64, scratch_operands = 0 : i64, tpu.core_type = #tpu.core_type<tc>, window_params = [{transform_indices = @transform_0, window_bounds = array<i64: 1, 8, 32>}, {transform_indices = @transform_1, window_bounds = array<i64: 1, 32, 8>}, {transform_indices = @transform_2, window_bounds = array<i64: 1, 32, 8>}, {transform_indices = @transform_3, window_bounds = array<i64: 1, 32, 8>}, {transform_indices = @transform_4, window_bounds = array<i64: 1, 1, 8, 8>}, {transform_indices = @transform_5, window_bounds = array<i64: 1, 1, 8, 8>}, {transform_indices = @transform_6, window_bounds = array<i64: 1, 1, 8, 8>}]} {
    %c0 = arith.constant 0 : index
    %c0_0 = arith.constant 0 : index
    %c0_1 = arith.constant 0 : index
    %0 = vector.load %arg3[%c0, %c0_0, %c0_1] : memref<1x8x32xf32, #tpu.memory_space<vmem>>, vector<1x8x32xf32>
    %1 = vector.shape_cast %0 : vector<1x8x32xf32> to vector<8x32xf32>
    %c0_2 = arith.constant 0 : index
    %c0_3 = arith.constant 0 : index
    %c0_4 = arith.constant 0 : index
    %2 = vector.load %arg4[%c0_2, %c0_3, %c0_4] : memref<1x32x8xf32, #tpu.memory_space<vmem>>, vector<1x32x8xf32>
    %3 = vector.shape_cast %2 : vector<1x32x8xf32> to vector<32x8xf32>
    %cst = arith.constant dense<0.000000e+00> : vector<8x8xf32>
    %4 = tpu.matmul %1, %3, %cst {dimension_numbers = #tpu.dot_dimension_numbers<[1], [0], [0], [1], [0, 0, 1, 1], [], []>} : vector<8x32xf32>, vector<32x8xf32>, vector<8x8xf32> -> vector<8x8xf32>
    %c0_5 = arith.constant 0 : index
    %c0_6 = arith.constant 0 : index
    %c0_7 = arith.constant 0 : index
    %5 = vector.load %arg5[%c0_5, %c0_6, %c0_7] : memref<1x32x8xf32, #tpu.memory_space<vmem>>, vector<1x32x8xf32>
    %6 = vector.shape_cast %5 : vector<1x32x8xf32> to vector<32x8xf32>
    %cst_8 = arith.constant dense<0.000000e+00> : vector<8x8xf32>
    %7 = tpu.matmul %1, %6, %cst_8 {dimension_numbers = #tpu.dot_dimension_numbers<[1], [0], [0], [1], [0, 0, 1, 1], [], []>} : vector<8x32xf32>, vector<32x8xf32>, vector<8x8xf32> -> vector<8x8xf32>
    %c0_9 = arith.constant 0 : index
    %c0_10 = arith.constant 0 : index
    %c0_11 = arith.constant 0 : index
    %8 = vector.load %arg6[%c0_9, %c0_10, %c0_11] : memref<1x32x8xf32, #tpu.memory_space<vmem>>, vector<1x32x8xf32>
    %9 = vector.shape_cast %8 : vector<1x32x8xf32> to vector<32x8xf32>
    %cst_12 = arith.constant dense<0.000000e+00> : vector<8x8xf32>
    %10 = tpu.matmul %1, %9, %cst_12 {dimension_numbers = #tpu.dot_dimension_numbers<[1], [0], [0], [1], [0, 0, 1, 1], [], []>} : vector<8x32xf32>, vector<32x8xf32>, vector<8x8xf32> -> vector<8x8xf32>
    %c0_13 = arith.constant 0 : index
    %c0_14 = arith.constant 0 : index
    %c0_15 = arith.constant 0 : index
    %c0_16 = arith.constant 0 : index
    %11 = vector.load %arg7[%c0_13, %c0_14, %c0_15, %c0_16] : memref<1x1x8x8xf32, #tpu.memory_space<vmem>>, vector<1x1x8x8xf32>
    %12 = vector.shape_cast %11 : vector<1x1x8x8xf32> to vector<8x8xf32>
    %13 = vector.shape_cast %4 : vector<8x8xf32> to vector<1x1x8x8xf32>
    tpu.vector_store %arg7[%c0_13, %c0_14, %c0_15, %c0_16], %13 {strides = array<i32>} : memref<1x1x8x8xf32, #tpu.memory_space<vmem>>, vector<1x1x8x8xf32>,
    %c0_17 = arith.constant 0 : index
    %c0_18 = arith.constant 0 : index
    %c0_19 = arith.constant 0 : index
    %c0_20 = arith.constant 0 : index
    %14 = vector.load %arg8[%c0_17, %c0_18, %c0_19, %c0_20] : memref<1x1x8x8xf32, #tpu.memory_space<vmem>>, vector<1x1x8x8xf32>
    %15 = vector.shape_cast %14 : vector<1x1x8x8xf32> to vector<8x8xf32>
    %16 = vector.shape_cast %7 : vector<8x8xf32> to vector<1x1x8x8xf32>
    tpu.vector_store %arg8[%c0_17, %c0_18, %c0_19, %c0_20], %16 {strides = array<i32>} : memref<1x1x8x8xf32, #tpu.memory_space<vmem>>, vector<1x1x8x8xf32>,
    %c0_21 = arith.constant 0 : index
    %c0_22 = arith.constant 0 : index
    %c0_23 = arith.constant 0 : index
    %c0_24 = arith.constant 0 : index
    %17 = vector.load %arg9[%c0_21, %c0_22, %c0_23, %c0_24] : memref<1x1x8x8xf32, #tpu.memory_space<vmem>>, vector<1x1x8x8xf32>
    %18 = vector.shape_cast %17 : vector<1x1x8x8xf32> to vector<8x8xf32>
    %19 = vector.shape_cast %10 : vector<8x8xf32> to vector<1x1x8x8xf32>
    tpu.vector_store %arg9[%c0_21, %c0_22, %c0_23, %c0_24], %19 {strides = array<i32>} : memref<1x1x8x8xf32, #tpu.memory_space<vmem>>, vector<1x1x8x8xf32>,
    return
  }
  func.func @transform_0(%arg0: i32, %arg1: i32, %arg2: i32) -> (i32, i32, i32) {
    %c0_i32 = arith.constant 0 : i32
    %c0_i32_0 = arith.constant 0 : i32
    return %arg0, %arg2, %c0_i32 : i32, i32, i32
  }
  func.func @transform_1(%arg0: i32, %arg1: i32, %arg2: i32) -> (i32, i32, i32) {
    %c0_i32 = arith.constant 0 : i32
    %c0_i32_0 = arith.constant 0 : i32
    %c0_i32_1 = arith.constant 0 : i32
    return %arg1, %c0_i32, %c0_i32_0 : i32, i32, i32
  }
  func.func @transform_2(%arg0: i32, %arg1: i32, %arg2: i32) -> (i32, i32, i32) {
    %c0_i32 = arith.constant 0 : i32
    %c0_i32_0 = arith.constant 0 : i32
    %c0_i32_1 = arith.constant 0 : i32
    return %arg1, %c0_i32, %c0_i32_0 : i32, i32, i32
  }
  func.func @transform_3(%arg0: i32, %arg1: i32, %arg2: i32) -> (i32, i32, i32) {
    %c0_i32 = arith.constant 0 : i32
    %c0_i32_0 = arith.constant 0 : i32
    %c0_i32_1 = arith.constant 0 : i32
    return %arg1, %c0_i32, %c0_i32_0 : i32, i32, i32
  }
  func.func @transform_4(%arg0: i32, %arg1: i32, %arg2: i32) -> (i32, i32, i32, i32) {
    %c0_i32 = arith.constant 0 : i32
    %c0_i32_0 = arith.constant 0 : i32
    return %arg0, %arg1, %arg2, %c0_i32 : i32, i32, i32, i32
  }
  func.func @transform_5(%arg0: i32, %arg1: i32, %arg2: i32) -> (i32, i32, i32, i32) {
    %c0_i32 = arith.constant 0 : i32
    %c0_i32_0 = arith.constant 0 : i32
    return %arg0, %arg1, %arg2, %c0_i32 : i32, i32, i32, i32
  }
  func.func @transform_6(%arg0: i32, %arg1: i32, %arg2: i32) -> (i32, i32, i32, i32) {
    %c0_i32 = arith.constant 0 : i32
    %c0_i32_0 = arith.constant 0 : i32
    return %arg0, %arg1, %arg2, %c0_i32 : i32, i32, i32, i32
  }
}

module attributes {stable_mosaic.version = 11 : i64} {
  func.func @_qkv_proj_kernel(%arg0: i32, %arg1: i32, %arg2: i32, %arg3: memref<1x8x32xf32, #tpu.memory_space<vmem>>, %arg4: memref<1x32x8xf32, #tpu.memory_space<vmem>>, %arg5: memref<1x32x8xf32, #tpu.memory_space<vmem>>, %arg6: memref<1x32x8xf32, #tpu.memory_space<vmem>>, %arg7: memref<1x1x8x8xf32, #tpu.memory_space<vmem>>, %arg8: memref<1x1x8x8xf32, #tpu.memory_space<vmem>>, %arg9: memref<1x1x8x8xf32, #tpu.memory_space<vmem>>) attributes {dimension_semantics = [#tpu.dimension_semantics<parallel>, #tpu.dimension_semantics<parallel>, #tpu.dimension_semantics<parallel>], iteration_bounds = array<i64: 2, 4, 2>, scalar_prefetch = 0 : i64, scratch_operands = 0 : i64, tpu.core_type = #tpu.core_type<tc>, window_params = [{transform_indices = @transform_0, window_bounds = array<i64: 1, 8, 32>}, {transform_indices = @transform_1, window_bounds = array<i64: 1, 32, 8>}, {transform_indices = @transform_2, window_bounds = array<i64: 1, 32, 8>}, {transform_indices = @transform_3, window_bounds = array<i64: 1, 32, 8>}, {transform_indices = @transform_4, window_bounds = array<i64: 1, 1, 8, 8>}, {transform_indices = @transform_5, window_bounds = array<i64: 1, 1, 8, 8>}, {transform_indices = @transform_6, window_bounds = array<i64: 1, 1, 8, 8>}]} {
    %c0 = arith.constant 0 : index
    %c0_0 = arith.constant 0 : index
    %c0_1 = arith.constant 0 : index
    %0 = vector.load %arg3[%c0, %c0_0, %c0_1] : memref<1x8x32xf32, #tpu.memory_space<vmem>>, vector<1x8x32xf32>
    %1 = vector.shape_cast %0 : vector<1x8x32xf32> to vector<8x32xf32>
    %c0_2 = arith.constant 0 : index
    %c0_3 = arith.constant 0 : index
    %c0_4 = arith.constant 0 : index
    %2 = vector.load %arg4[%c0_2, %c0_3, %c0_4] : memref<1x32x8xf32, #tpu.memory_space<vmem>>, vector<1x32x8xf32>
    %3 = vector.shape_cast %2 : vector<1x32x8xf32> to vector<32x8xf32>
    %cst = arith.constant dense<0.000000e+00> : vector<8x8xf32>
    %4 = tpu.matmul %1, %3, %cst {dimension_numbers = #tpu.dot_dimension_numbers<[1], [0], [0], [1], [0, 0, 1, 1], [], []>} : vector<8x32xf32>, vector<32x8xf32>, vector<8x8xf32> -> vector<8x8xf32>
    %c0_5 = arith.constant 0 : index
    %c0_6 = arith.constant 0 : index
    %c0_7 = arith.constant 0 : index
    %5 = vector.load %arg5[%c0_5, %c0_6, %c0_7] : memref<1x32x8xf32, #tpu.memory_space<vmem>>, vector<1x32x8xf32>
    %6 = vector.shape_cast %5 : vector<1x32x8xf32> to vector<32x8xf32>
    %cst_8 = arith.constant dense<0.000000e+00> : vector<8x8xf32>
    %7 = tpu.matmul %1, %6, %cst_8 {dimension_numbers = #tpu.dot_dimension_numbers<[1], [0], [0], [1], [0, 0, 1, 1], [], []>} : vector<8x32xf32>, vector<32x8xf32>, vector<8x8xf32> -> vector<8x8xf32>
    %c0_9 = arith.constant 0 : index
    %c0_10 = arith.constant 0 : index
    %c0_11 = arith.constant 0 : index
    %8 = vector.load %arg6[%c0_9, %c0_10, %c0_11] : memref<1x32x8xf32, #tpu.memory_space<vmem>>, vector<1x32x8xf32>
    %9 = vector.shape_cast %8 : vector<1x32x8xf32> to vector<32x8xf32>
    %cst_12 = arith.constant dense<0.000000e+00> : vector<8x8xf32>
    %10 = tpu.matmul %1, %9, %cst_12 {dimension_numbers = #tpu.dot_dimension_numbers<[1], [0], [0], [1], [0, 0, 1, 1], [], []>} : vector<8x32xf32>, vector<32x8xf32>, vector<8x8xf32> -> vector<8x8xf32>
    %c0_13 = arith.constant 0 : index
    %c0_14 = arith.constant 0 : index
    %c0_15 = arith.constant 0 : index
    %c0_16 = arith.constant 0 : index
    %11 = vector.load %arg7[%c0_13, %c0_14, %c0_15, %c0_16] : memref<1x1x8x8xf32, #tpu.memory_space<vmem>>, vector<1x1x8x8xf32>
    %12 = vector.shape_cast %11 : vector<1x1x8x8xf32> to vector<8x8xf32>
    %13 = vector.shape_cast %4 : vector<8x8xf32> to vector<1x1x8x8xf32>
    tpu.vector_store %arg7[%c0_13, %c0_14, %c0_15, %c0_16], %13 {strides = array<i32>} : memref<1x1x8x8xf32, #tpu.memory_space<vmem>>, vector<1x1x8x8xf32>,
    %c0_17 = arith.constant 0 : index
    %c0_18 = arith.constant 0 : index
    %c0_19 = arith.constant 0 : index
    %c0_20 = arith.constant 0 : index
    %14 = vector.load %arg8[%c0_17, %c0_18, %c0_19, %c0_20] : memref<1x1x8x8xf32, #tpu.memory_space<vmem>>, vector<1x1x8x8xf32>
    %15 = vector.shape_cast %14 : vector<1x1x8x8xf32> to vector<8x8xf32>
    %16 = vector.shape_cast %7 : vector<8x8xf32> to vector<1x1x8x8xf32>
    tpu.vector_store %arg8[%c0_17, %c0_18, %c0_19, %c0_20], %16 {strides = array<i32>} : memref<1x1x8x8xf32, #tpu.memory_space<vmem>>, vector<1x1x8x8xf32>,
    %c0_21 = arith.constant 0 : index
    %c0_22 = arith.constant 0 : index
    %c0_23 = arith.constant 0 : index
    %c0_24 = arith.constant 0 : index
    %17 = vector.load %arg9[%c0_21, %c0_22, %c0_23, %c0_24] : memref<1x1x8x8xf32, #tpu.memory_space<vmem>>, vector<1x1x8x8xf32>
    %18 = vector.shape_cast %17 : vector<1x1x8x8xf32> to vector<8x8xf32>
    %19 = vector.shape_cast %10 : vector<8x8xf32> to vector<1x1x8x8xf32>
    tpu.vector_store %arg9[%c0_21, %c0_22, %c0_23, %c0_24], %19 {strides = array<i32>} : memref<1x1x8x8xf32, #tpu.memory_space<vmem>>, vector<1x1x8x8xf32>,
    return
  }
  func.func @transform_0(%arg0: i32, %arg1: i32, %arg2: i32) -> (i32, i32, i32) {
    %c0_i32 = arith.constant 0 : i32
    %c0_i32_0 = arith.constant 0 : i32
    return %arg0, %arg2, %c0_i32 : i32, i32, i32
  }
  func.func @transform_1(%arg0: i32, %arg1: i32, %arg2: i32) -> (i32, i32, i32) {
    %c0_i32 = arith.constant 0 : i32
    %c0_i32_0 = arith.constant 0 : i32
    %c0_i32_1 = arith.constant 0 : i32
    return %arg1, %c0_i32, %c0_i32_0 : i32, i32, i32
  }
  func.func @transform_2(%arg0: i32, %arg1: i32, %arg2: i32) -> (i32, i32, i32) {
    %c0_i32 = arith.constant 0 : i32
    %c0_i32_0 = arith.constant 0 : i32
    %c0_i32_1 = arith.constant 0 : i32
    return %arg1, %c0_i32, %c0_i32_0 : i32, i32, i32
  }
  func.func @transform_3(%arg0: i32, %arg1: i32, %arg2: i32) -> (i32, i32, i32) {
    %c0_i32 = arith.constant 0 : i32
    %c0_i32_0 = arith.constant 0 : i32
    %c0_i32_1 = arith.constant 0 : i32
    return %arg1, %c0_i32, %c0_i32_0 : i32, i32, i32
  }
  func.func @transform_4(%arg0: i32, %arg1: i32, %arg2: i32) -> (i32, i32, i32, i32) {
    %c0_i32 = arith.constant 0 : i32
    %c0_i32_0 = arith.constant 0 : i32
    return %arg0, %arg1, %arg2, %c0_i32 : i32, i32, i32, i32
  }
  func.func @transform_5(%arg0: i32, %arg1: i32, %arg2: i32) -> (i32, i32, i32, i32) {
    %c0_i32 = arith.constant 0 : i32
    %c0_i32_0 = arith.constant 0 : i32
    return %arg0, %arg1, %arg2, %c0_i32 : i32, i32, i32, i32
  }
  func.func @transform_6(%arg0: i32, %arg1: i32, %arg2: i32) -> (i32, i32, i32, i32) {
    %c0_i32 = arith.constant 0 : i32
    %c0_i32_0 = arith.constant 0 : i32
    return %arg0, %arg1, %arg2, %c0_i32 : i32, i32, i32, i32
  }
}

</mosaic_0001>

<llo_original>
// kernel: tpu_custom_call.1
$region0: #{tpu_custom_call.1}
  #allocation0 [shape = 'u32[]', space=smem, size = 0x4, offset = 0x4, fixed_abs, tag = 'smem constant byte address 0x4 - core index']
  #allocation1 [shape = 'u32[72,128]{1,0:T(1,128)}', space=vmem, size = 0x9000, scoped, tag = 'internal scratch']
  %s0 = inlined_call_operand.vmem [shape: f32[2,16,32], index: 0, kind: input, shape index: {}]
  %s1 = inlined_call_operand.vmem [shape: f32[4,32,8], index: 1, kind: input, shape index: {}]
  %s2 = inlined_call_operand.vmem [shape: f32[4,32,8], index: 2, kind: input, shape index: {}]
  %s3 = inlined_call_operand.vmem [shape: f32[4,32,8], index: 3, kind: input, shape index: {}]
  %s4 = inlined_call_operand.vmem [shape: f32[2,4,16,8], index: 4, kind: output, shape index: {0}]
  %s5 = inlined_call_operand.vmem [shape: f32[2,4,16,8], index: 5, kind: output, shape index: {1}]
  %s6 = inlined_call_operand.vmem [shape: f32[2,4,16,8], index: 6, kind: output, shape index: {2}]
  %7 = xla_tuple %s4, %s5, %s6
  %s8 = sld [smem:[#allocation0]]
  $region65: #{tpu_custom_call.1} parent=0
    _
  %s10 = ssub.s32 1, %s8
  %s11 = scalar_select 0, %s10, %s8
  loop: start=0, step=1, limit=18
  $region2: #{tpu_custom_call.1} parent=0 // loop_pre_header
    _
  $region3: #{tpu_custom_call.1} parent=0 // loop_header
    %s13 = sphi 0, %s17
    %p14 = scmp.ge.s32.totalorder %s13, 18
    %s20 = sphi 0, %s39
    %s21 = sphi 0, %s35
    %s22 = sphi 0, %s31
    %s23 = sphi 0, %s20
    %s24 = sphi 0, %s21
    %s25 = sphi 0, %s22
    %s26 = sphi 0, %s23
    %s27 = sphi 0, %s24
    %s28 = sphi 0, %s25
    %s44 = sphi 0, %s46
    %s47 = sphi 0, %s44
    %s48 = sphi 0, %s47
    %s64 = sphi 0, %s48
    %s70 = sphi 0, %s72
    %s73 = sphi 0, %s70
    %s74 = sphi 0, %s73
    %s90 = sphi 0, %s74
    %s96 = sphi 0, %s98
    %s99 = sphi 0, %s96
    %s100 = sphi 0, %s99
    %s116 = sphi 0, %s100
    %s122 = sphi 0, %s124
    %s125 = sphi 0, %s122
    %s126 = sphi 0, %s125
    %s142 = sphi 0, %s126
    %s152 = sphi 0, %s154
    %s155 = sphi 0, %s152
    %s156 = sphi 0, %s155
    %s172 = sphi 0, %s156
    %s182 = sphi 0, %s184
    %s185 = sphi 0, %s182
    %s186 = sphi 0, %s185
    %s202 = sphi 0, %s186
    %s212 = sphi 0, %s214
    %s215 = sphi 0, %s212
    %s216 = sphi 0, %s215
    %s232 = sphi 0, %s216
  $region4: #{tpu_custom_call.1} parent=0 // loop_header_branch
    %16 = sbr.rel (%p14) target = $region8
  $region5: #{tpu_custom_call.1} parent=0 // loop_body
    %s18 = ssub.s32 %s13, 1
    %s19 = ssub.s32 %s13, 2
    %s29 = sadd.s32 1, %s22
    %p30 = scmp.ge.s32.totalorder %s29, 2
    %s31 = scalar_select %p30, 0, %s29
    %s32 = sadd.s32 1, %s21
    %s33 = scalar_select %p30, %s32, %s21
    %p34 = scmp.ge.s32.totalorder %s33, 4
    %s35 = scalar_select %p34, 0, %s33
    %s36 = sadd.s32 1, %s20
    %s37 = scalar_select %p34, %s36, %s20
    %p38 = scmp.ge.s32.totalorder %s37, 2
    %s39 = scalar_select %p38, 0, %s37
    %s40 = ssub.s32 %s20, %s39
    %s41 = ssub.s32 %s22, %s31
    %s42 = sor.u32 %s40, %s41
    %p43 = scmp.eq.s32.totalorder %s42, 0
    %s45 = sadd.s32 %s44, 1
    %s46 = scalar_select %p43, %s44, %s45
    %p49 = pneg %p43
    %p50 = scmp.eq.s32.totalorder %s13, 15
    %p51 = por %p49, %p50
    %p52 = scmp.ne.s32.totalorder %s44, %s47
    %p53 = scmp.eq.s32.totalorder %s13, 0
    %p54 = por %p52, %p53
    %p55 = scmp.ne.s32.totalorder %s44, %s47
    %p56 = scmp.eq.s32.totalorder %s18, 15
    %p57 = por %p55, %p56
    %p58 = scmp.ne.s32.totalorder %s47, %s48
    %p59 = scmp.eq.s32.totalorder %s18, 0
    %p60 = por %p58, %p59
    %p61 = scmp.ne.s32.totalorder %s47, %s48
    %p62 = scmp.eq.s32.totalorder %s19, 15
    %p63 = por %p61, %p62
    %p65 = scmp.ne.s32.totalorder %s48, %s64
    %p66 = scmp.eq.s32.totalorder %s19, 0
    %p67 = por %p65, %p66
    %s68 = ssub.s32 %s21, %s35
    %p69 = scmp.eq.s32.totalorder %s68, 0
    %s71 = sadd.s32 %s70, 1
    %s72 = scalar_select %p69, %s70, %s71
    %p75 = pneg %p69
    %p76 = scmp.eq.s32.totalorder %s13, 15
    %p77 = por %p75, %p76
    %p78 = scmp.ne.s32.totalorder %s70, %s73
    %p79 = scmp.eq.s32.totalorder %s13, 0
    %p80 = por %p78, %p79
    %p81 = scmp.ne.s32.totalorder %s70, %s73
    %p82 = scmp.eq.s32.totalorder %s18, 15
    %p83 = por %p81, %p82
    %p84 = scmp.ne.s32.totalorder %s73, %s74
    %p85 = scmp.eq.s32.totalorder %s18, 0
    %p86 = por %p84, %p85
    %p87 = scmp.ne.s32.totalorder %s73, %s74
    %p88 = scmp.eq.s32.totalorder %s19, 15
    %p89 = por %p87, %p88
    %p91 = scmp.ne.s32.totalorder %s74, %s90
    %p92 = scmp.eq.s32.totalorder %s19, 0
    %p93 = por %p91, %p92
    %s94 = ssub.s32 %s21, %s35
    %p95 = scmp.eq.s32.totalorder %s94, 0
    %s97 = sadd.s32 %s96, 1
    %s98 = scalar_select %p95, %s96, %s97
    %p101 = pneg %p95
    %p102 = scmp.eq.s32.totalorder %s13, 15
    %p103 = por %p101, %p102
    %p104 = scmp.ne.s32.totalorder %s96, %s99
    %p105 = scmp.eq.s32.totalorder %s13, 0
    %p106 = por %p104, %p105
    %p107 = scmp.ne.s32.totalorder %s96, %s99
    %p108 = scmp.eq.s32.totalorder %s18, 15
    %p109 = por %p107, %p108
    %p110 = scmp.ne.s32.totalorder %s99, %s100
    %p111 = scmp.eq.s32.totalorder %s18, 0
    %p112 = por %p110, %p111
    %p113 = scmp.ne.s32.totalorder %s99, %s100
    %p114 = scmp.eq.s32.totalorder %s19, 15
    %p115 = por %p113, %p114
    %p117 = scmp.ne.s32.totalorder %s100, %s116
    %p118 = scmp.eq.s32.totalorder %s19, 0
    %p119 = por %p117, %p118
    %s120 = ssub.s32 %s21, %s35
    %p121 = scmp.eq.s32.totalorder %s120, 0
    %s123 = sadd.s32 %s122, 1
    %s124 = scalar_select %p121, %s122, %s123
    %p127 = pneg %p121
    %p128 = scmp.eq.s32.totalorder %s13, 15
    %p129 = por %p127, %p128
    %p130 = scmp.ne.s32.totalorder %s122, %s125
    %p131 = scmp.eq.s32.totalorder %s13, 0
    %p132 = por %p130, %p131
    %p133 = scmp.ne.s32.totalorder %s122, %s125
    %p134 = scmp.eq.s32.totalorder %s18, 15
    %p135 = por %p133, %p134
    %p136 = scmp.ne.s32.totalorder %s125, %s126
    %p137 = scmp.eq.s32.totalorder %s18, 0
    %p138 = por %p136, %p137
    %p139 = scmp.ne.s32.totalorder %s125, %s126
    %p140 = scmp.eq.s32.totalorder %s19, 15
    %p141 = por %p139, %p140
    %p143 = scmp.ne.s32.totalorder %s126, %s142
    %p144 = scmp.eq.s32.totalorder %s19, 0
    %p145 = por %p143, %p144
    %s146 = ssub.s32 %s20, %s39
    %s147 = ssub.s32 %s21, %s35
    %s148 = sor.u32 %s146, %s147
    %s149 = ssub.s32 %s22, %s31
    %s150 = sor.u32 %s148, %s149
    %p151 = scmp.eq.s32.totalorder %s150, 0
    %s153 = sadd.s32 %s152, 1
    %s154 = scalar_select %p151, %s152, %s153
    %p157 = pneg %p151
    %p158 = scmp.eq.s32.totalorder %s13, 15
    %p159 = por %p157, %p158
    %p160 = scmp.ne.s32.totalorder %s152, %s155
    %p161 = scmp.eq.s32.totalorder %s13, 0
    %p162 = por %p160, %p161
    %p163 = scmp.ne.s32.totalorder %s152, %s155
    %p164 = scmp.eq.s32.totalorder %s18, 15
    %p165 = por %p163, %p164
    %p166 = scmp.ne.s32.totalorder %s155, %s156
    %p167 = scmp.eq.s32.totalorder %s18, 0
    %p168 = por %p166, %p167
    %p169 = scmp.ne.s32.totalorder %s155, %s156
    %p170 = scmp.eq.s32.totalorder %s19, 15
    %p171 = por %p169, %p170
    %p173 = scmp.ne.s32.totalorder %s156, %s172
    %p174 = scmp.eq.s32.totalorder %s19, 0
    %p175 = por %p173, %p174
    %s176 = ssub.s32 %s20, %s39
    %s177 = ssub.s32 %s21, %s35
    %s178 = sor.u32 %s176, %s177
    %s179 = ssub.s32 %s22, %s31
    %s180 = sor.u32 %s178, %s179
    %p181 = scmp.eq.s32.totalorder %s180, 0
    %s183 = sadd.s32 %s182, 1
    %s184 = scalar_select %p181, %s182, %s183
    %p187 = pneg %p181
    %p188 = scmp.eq.s32.totalorder %s13, 15
    %p189 = por %p187, %p188
    %p190 = scmp.ne.s32.totalorder %s182, %s185
    %p191 = scmp.eq.s32.totalorder %s13, 0
    %p192 = por %p190, %p191
    %p193 = scmp.ne.s32.totalorder %s182, %s185
    %p194 = scmp.eq.s32.totalorder %s18, 15
    %p195 = por %p193, %p194
    %p196 = scmp.ne.s32.totalorder %s185, %s186
    %p197 = scmp.eq.s32.totalorder %s18, 0
    %p198 = por %p196, %p197
    %p199 = scmp.ne.s32.totalorder %s185, %s186
    %p200 = scmp.eq.s32.totalorder %s19, 15
    %p201 = por %p199, %p200
    %p203 = scmp.ne.s32.totalorder %s186, %s202
    %p204 = scmp.eq.s32.totalorder %s19, 0
    %p205 = por %p203, %p204
    %s206 = ssub.s32 %s20, %s39
    %s207 = ssub.s32 %s21, %s35
    %s208 = sor.u32 %s206, %s207
    %s209 = ssub.s32 %s22, %s31
    %s210 = sor.u32 %s208, %s209
    %p211 = scmp.eq.s32.totalorder %s210, 0
    %s213 = sadd.s32 %s212, 1
    %s214 = scalar_select %p211, %s212, %s213
    %p217 = pneg %p211
    %p218 = scmp.eq.s32.totalorder %s13, 15
    %p219 = por %p217, %p218
    %p220 = scmp.ne.s32.totalorder %s212, %s215
    %p221 = scmp.eq.s32.totalorder %s13, 0
    %p222 = por %p220, %p221
    %p223 = scmp.ne.s32.totalorder %s212, %s215
    %p224 = scmp.eq.s32.totalorder %s18, 15
    %p225 = por %p223, %p224
    %p226 = scmp.ne.s32.totalorder %s215, %s216
    %p227 = scmp.eq.s32.totalorder %s18, 0
    %p228 = por %p226, %p227
    %p229 = scmp.ne.s32.totalorder %s215, %s216
    %p230 = scmp.eq.s32.totalorder %s19, 15
    %p231 = por %p229, %p230
    %p233 = scmp.ne.s32.totalorder %s216, %s232
    %p234 = scmp.eq.s32.totalorder %s19, 0
    %p235 = por %p233, %p234
    %p236 = scmp.le.s32.totalorder 1, %s13
    %p237 = scmp.lt.s32.totalorder %s13, 17
    %p238 = pnand %p236, %p237
    %p239 = pneg %p238
    // Predicated region
    $region9: #{tpu_custom_call.1} parent=5 // pred_check
      _
    $region10: #{tpu_custom_call.1} parent=5 // pred_check_branch
      %241 = sbr.rel (%p238) target = $region12
    $region11: #{tpu_custom_call.1} parent=5 // pred_region
      %s242 = ssub.s32 %s13, 1
    $region12: #{tpu_custom_call.1} parent=5 // pred_fallthru
      _
    %p243 = scmp.lt.s32.totalorder %s13, 16
    // Predicated region
    $region13: #{tpu_custom_call.1} parent=5 // pred_check
      %p244 = pneg %p243
    $region14: #{tpu_custom_call.1} parent=5 // pred_check_branch
      %246 = sbr.rel (%p244) target = $region16
    $region15: #{tpu_custom_call.1} parent=5 // pred_region
      // Predicated region
      $region17: #{tpu_custom_call.1} parent=15 // pred_check
        %p247 = pneg %p54
      $region18: #{tpu_custom_call.1} parent=15 // pred_check_branch
        %249 = sbr.rel (%p247) target = $region20
      $region19: #{tpu_custom_call.1} parent=15 // pred_region
        %p250 = scmp.lt.s32.totalorder %s20, 1
        %s251 = scalar_select %p250, %s20, 1
        %p252 = scmp.lt.s32.totalorder %s22, 1
        %s253 = scalar_select %p252, %s22, 1
        %s254 = smul.addr %s251, 2
        %s255 = sadd.s32 %s253, %s254
        %s256 = smul.addr %s255, 8
        %s257 = scalar_lea.vmem %s0, %s256
      $region20: #{tpu_custom_call.1} parent=15 // pred_fallthru
        _
      // Predicated region
      $region21: #{tpu_custom_call.1} parent=15 // pred_check
        %p258 = pneg %p80
      $region22: #{tpu_custom_call.1} parent=15 // pred_check_branch
        %260 = sbr.rel (%p258) target = $region24
      $region23: #{tpu_custom_call.1} parent=15 // pred_region
        %p261 = scmp.lt.s32.totalorder %s21, 3
        %s262 = scalar_select %p261, %s21, 3
        %s263 = smul.addr %s262, 4
        %s264 = smul.addr %s263, 8
        %s265 = scalar_lea.vmem %s1, %s264
      $region24: #{tpu_custom_call.1} parent=15 // pred_fallthru
        _
      // Predicated region
      $region25: #{tpu_custom_call.1} parent=15 // pred_check
        %p266 = pneg %p106
      $region26: #{tpu_custom_call.1} parent=15 // pred_check_branch
        %268 = sbr.rel (%p266) target = $region28
      $region27: #{tpu_custom_call.1} parent=15 // pred_region
        %p269 = scmp.lt.s32.totalorder %s21, 3
        %s270 = scalar_select %p269, %s21, 3
        %s271 = smul.addr %s270, 4
        %s272 = smul.addr %s271, 8
        %s273 = scalar_lea.vmem %s2, %s272
      $region28: #{tpu_custom_call.1} parent=15 // pred_fallthru
        _
      // Predicated region
      $region29: #{tpu_custom_call.1} parent=15 // pred_check
        %p274 = pneg %p132
      $region30: #{tpu_custom_call.1} parent=15 // pred_check_branch
        %276 = sbr.rel (%p274) target = $region32
      $region31: #{tpu_custom_call.1} parent=15 // pred_region
        %p277 = scmp.lt.s32.totalorder %s21, 3
        %s278 = scalar_select %p277, %s21, 3
        %s279 = smul.addr %s278, 4
        %s280 = smul.addr %s279, 8
        %s281 = scalar_lea.vmem %s3, %s280
      $region32: #{tpu_custom_call.1} parent=15 // pred_fallthru
        _
    $region16: #{tpu_custom_call.1} parent=5 // pred_fallthru
      _
    %p282 = scmp.le.s32.totalorder 1, %s13
    %p283 = scmp.lt.s32.totalorder %s13, 17
    %p284 = pnand %p282, %p283
    %p285 = pneg %p284
    // Predicated region
    $region33: #{tpu_custom_call.1} parent=5 // pred_check
      _
    $region34: #{tpu_custom_call.1} parent=5 // pred_check_branch
      %287 = sbr.rel (%p284) target = $region36
    $region35: #{tpu_custom_call.1} parent=5 // pred_region
      %s288 = ssub.s32 %s13, 1
      %p289 = scmp.lt.s32.totalorder %s23, 1
      %s290 = scalar_select %p289, %s23, 1
      %p291 = scmp.lt.s32.totalorder %s25, 1
      %s292 = scalar_select %p291, %s25, 1
      %s293 = smul.addr %s290, 2
      %s294 = sadd.s32 %s292, %s293
      %s295 = smul.addr %s294, 8
      %s296 = scalar_lea.vmem %s0, %s295
      %p297 = pneg %p60
      %p298 = pneg %p57
      %p299 = scmp.lt.s32.totalorder %s24, 3
      %s300 = scalar_select %p299, %s24, 3
      %s301 = smul.addr %s300, 4
      %s302 = smul.addr %s301, 8
      %s303 = scalar_lea.vmem %s1, %s302
      %p304 = pneg %p86
      %p305 = pneg %p83
      %p306 = scmp.lt.s32.totalorder %s24, 3
      %s307 = scalar_select %p306, %s24, 3
      %s308 = smul.addr %s307, 4
      %s309 = smul.addr %s308, 8
      %s310 = scalar_lea.vmem %s2, %s309
      %p311 = pneg %p112
      %p312 = pneg %p109
      %p313 = scmp.lt.s32.totalorder %s24, 3
      %s314 = scalar_select %p313, %s24, 3
      %s315 = smul.addr %s314, 4
      %s316 = smul.addr %s315, 8
      %s317 = scalar_lea.vmem %s3, %s316
      %p318 = pneg %p138
      %p319 = pneg %p135
      %p320 = pneg %p168
      %p321 = pneg %p165
      %p322 = scmp.lt.s32.totalorder %s23, 1
      %s323 = scalar_select %p322, %s23, 1
      %p324 = scmp.lt.s32.totalorder %s24, 3
      %s325 = scalar_select %p324, %s24, 3
      %p326 = scmp.lt.s32.totalorder %s25, 1
      %s327 = scalar_select %p326, %s25, 1
      %s328 = smul.addr %s325, 2
      %s329 = sadd.s32 %s327, %s328
      %s330 = smul.addr %s323, 8
      %s331 = sadd.s32 %s329, %s330
      %s332 = smul.addr %s331, 8
      %s333 = scalar_lea.vmem %s4, %s332
      %p334 = pneg %p198
      %p335 = pneg %p195
      %p336 = scmp.lt.s32.totalorder %s23, 1
      %s337 = scalar_select %p336, %s23, 1
      %p338 = scmp.lt.s32.totalorder %s24, 3
      %s339 = scalar_select %p338, %s24, 3
      %p340 = scmp.lt.s32.totalorder %s25, 1
      %s341 = scalar_select %p340, %s25, 1
      %s342 = smul.addr %s339, 2
      %s343 = sadd.s32 %s341, %s342
      %s344 = smul.addr %s337, 8
      %s345 = sadd.s32 %s343, %s344
      %s346 = smul.addr %s345, 8
      %s347 = scalar_lea.vmem %s5, %s346
      %p348 = pneg %p228
      %p349 = pneg %p225
      %p350 = scmp.lt.s32.totalorder %s23, 1
      %s351 = scalar_select %p350, %s23, 1
      %p352 = scmp.lt.s32.totalorder %s24, 3
      %s353 = scalar_select %p352, %s24, 3
      %p354 = scmp.lt.s32.totalorder %s25, 1
      %s355 = scalar_select %p354, %s25, 1
      %s356 = smul.addr %s353, 2
      %s357 = sadd.s32 %s355, %s356
      %s358 = smul.addr %s351, 8
      %s359 = sadd.s32 %s357, %s358
      %s360 = smul.addr %s359, 8
      %s361 = scalar_lea.vmem %s6, %s360
      %p362 = scmp.lt.s32.totalorder %s23, 1
      %s363 = scalar_select %p362, %s23, 1
      %p364 = scmp.lt.s32.totalorder %s25, 1
      %s365 = scalar_select %p364, %s25, 1
      %s366 = smul.addr %s363, 2
      %s367 = sadd.s32 %s365, %s366
      %s368 = smul.addr %s367, 8
      %s369 = scalar_lea.vmem %s0, %s368
      %p370 = scmp.lt.s32.totalorder %s24, 3
      %s371 = scalar_select %p370, %s24, 3
      %s372 = smul.addr %s371, 4
      %s373 = smul.addr %s372, 8
      %s374 = scalar_lea.vmem %s1, %s373
      %p375 = scmp.lt.s32.totalorder %s24, 3
      %s376 = scalar_select %p375, %s24, 3
      %s377 = smul.addr %s376, 4
      %s378 = smul.addr %s377, 8
      %s379 = scalar_lea.vmem %s2, %s378
      %p380 = scmp.lt.s32.totalorder %s24, 3
      %s381 = scalar_select %p380, %s24, 3
      %s382 = smul.addr %s381, 4
      %s383 = smul.addr %s382, 8
      %s384 = scalar_lea.vmem %s3, %s383
      %p385 = scmp.lt.s32.totalorder %s23, 1
      %s386 = scalar_select %p385, %s23, 1
      %p387 = scmp.lt.s32.totalorder %s24, 3
      %s388 = scalar_select %p387, %s24, 3
      %p389 = scmp.lt.s32.totalorder %s25, 1
      %s390 = scalar_select %p389, %s25, 1
      %s391 = smul.addr %s388, 2
      %s392 = sadd.s32 %s390, %s391
      %s393 = smul.addr %s386, 8
      %s394 = sadd.s32 %s392, %s393
      %s395 = smul.addr %s394, 8
      %s396 = scalar_lea.vmem %s4, %s395
      %p397 = scmp.lt.s32.totalorder %s23, 1
      %s398 = scalar_select %p397, %s23, 1
      %p399 = scmp.lt.s32.totalorder %s24, 3
      %s400 = scalar_select %p399, %s24, 3
      %p401 = scmp.lt.s32.totalorder %s25, 1
      %s402 = scalar_select %p401, %s25, 1
      %s403 = smul.addr %s400, 2
      %s404 = sadd.s32 %s402, %s403
      %s405 = smul.addr %s398, 8
      %s406 = sadd.s32 %s404, %s405
      %s407 = smul.addr %s406, 8
      %s408 = scalar_lea.vmem %s5, %s407
      %p409 = scmp.lt.s32.totalorder %s23, 1
      %s410 = scalar_select %p409, %s23, 1
      %p411 = scmp.lt.s32.totalorder %s24, 3
      %s412 = scalar_select %p411, %s24, 3
      %p413 = scmp.lt.s32.totalorder %s25, 1
      %s414 = scalar_select %p413, %s25, 1
      %s415 = smul.addr %s412, 2
      %s416 = sadd.s32 %s414, %s415
      %s417 = smul.addr %s410, 8
      %s418 = sadd.s32 %s416, %s417
      %s419 = smul.addr %s418, 8
      %s420 = scalar_lea.vmem %s6, %s419
      %v421 = vld [vmem:[%s369] sm:$0xff]
      %v422 = vld [vmem:[%s374] sm:$0xff]
      %v423 = vld [vmem:[%s374 + $0x8] sm:$0xff]
      %v424 = vld [vmem:[%s374 + $0x10] sm:$0xff]
      %v425 = vld [vmem:[%s374 + $0x18] sm:$0xff]
      %vm426 = vcmask 261120
      %v428 = vsel %vm426, %v421, 0
      %430 = vmatpush.msra.mxu0 0.0
      %431 = vmatpush.msra.mxu0 0.0
      %432 = vmatpush.msra.mxu0 0.0
      %433 = vmatpush.msra.mxu0 0.0
      %434 = vmatpush.msra.mxu0 0.0
      %435 = vmatpush.msra.mxu0 0.0
      %436 = vmatpush.msra.mxu0 0.0
      %437 = vmatpush.msra.mxu0 0.0
      %438 = vmatpush.msra.mxu0 0.0
      %439 = vmatpush.msra.mxu0 0.0
      %440 = vmatpush.msra.mxu0 0.0
      %441 = vmatpush.msra.mxu0 0.0
      %442 = vmatpush.msra.mxu0 %v425
      %443 = vmatpush.msra.mxu0 %v424
      %444 = vmatpush.msra.mxu0 %v423
      %445 = vmatpush.msra.mxu0 %v422
      %446 = vmatmul.f32.gmra.mxu0 %v428
      %v447 = vpop.f32.mrf.mxu0
      %v448 = vadd.f32 0.0, %v447
      %449 = vdwg.mxu0
      %v450 = vld [vmem:[%s379] sm:$0xff]
      %v451 = vld [vmem:[%s379 + $0x8] sm:$0xff]
      %v452 = vld [vmem:[%s379 + $0x10] sm:$0xff]
      %v453 = vld [vmem:[%s379 + $0x18] sm:$0xff]
      %454 = vmatpush.msra.mxu0 0.0
      %455 = vmatpush.msra.mxu0 0.0
      %456 = vmatpush.msra.mxu0 0.0
      %457 = vmatpush.msra.mxu0 0.0
      %458 = vmatpush.msra.mxu0 0.0
      %459 = vmatpush.msra.mxu0 0.0
      %460 = vmatpush.msra.mxu0 0.0
      %461 = vmatpush.msra.mxu0 0.0
      %462 = vmatpush.msra.mxu0 0.0
      %463 = vmatpush.msra.mxu0 0.0
      %464 = vmatpush.msra.mxu0 0.0
      %465 = vmatpush.msra.mxu0 0.0
      %466 = vmatpush.msra.mxu0 %v453
      %467 = vmatpush.msra.mxu0 %v452
      %468 = vmatpush.msra.mxu0 %v451
      %469 = vmatpush.msra.mxu0 %v450
      %470 = vmatmul.f32.gmra.mxu0 %v428
      %v471 = vpop.f32.mrf.mxu0
      %v472 = vadd.f32 0.0, %v471
      %473 = vdwg.mxu0
      %v474 = vld [vmem:[%s384] sm:$0xff]
      %v475 = vld [vmem:[%s384 + $0x8] sm:$0xff]
      %v476 = vld [vmem:[%s384 + $0x10] sm:$0xff]
      %v477 = vld [vmem:[%s384 + $0x18] sm:$0xff]
      %478 = vmatpush.msra.mxu0 0.0
      %479 = vmatpush.msra.mxu0 0.0
      %480 = vmatpush.msra.mxu0 0.0
      %481 = vmatpush.msra.mxu0 0.0
      %482 = vmatpush.msra.mxu0 0.0
      %483 = vmatpush.msra.mxu0 0.0
      %484 = vmatpush.msra.mxu0 0.0
      %485 = vmatpush.msra.mxu0 0.0
      %486 = vmatpush.msra.mxu0 0.0
      %487 = vmatpush.msra.mxu0 0.0
      %488 = vmatpush.msra.mxu0 0.0
      %489 = vmatpush.msra.mxu0 0.0
      %490 = vmatpush.msra.mxu0 %v477
      %491 = vmatpush.msra.mxu0 %v476
      %492 = vmatpush.msra.mxu0 %v475
      %493 = vmatpush.msra.mxu0 %v474
      %494 = vmatmul.f32.gmra.mxu0 %v428
      %v495 = vpop.f32.mrf.mxu0
      %v496 = vadd.f32 0.0, %v495
      %497 = vdwg.mxu0
      %vm498 = vcmask 64512
      %499 = vst.msk [vmem:[%s396] sm:$0xff] %vm498, %v448
      %500 = vst.msk [vmem:[%s408] sm:$0xff] %vm498, %v472
      %501 = vst.msk [vmem:[%s420] sm:$0xff] %vm498, %v496
      %p502 = scmp.lt.s32.totalorder %s23, 1
      %s503 = scalar_select %p502, %s23, 1
      %p504 = scmp.lt.s32.totalorder %s24, 3
      %s505 = scalar_select %p504, %s24, 3
      %p506 = scmp.lt.s32.totalorder %s25, 1
      %s507 = scalar_select %p506, %s25, 1
      %s508 = smul.addr %s505, 2
      %s509 = sadd.s32 %s507, %s508
      %s510 = smul.addr %s503, 8
      %s511 = sadd.s32 %s509, %s510
      %s512 = smul.addr %s511, 8
      %s513 = scalar_lea.vmem %s4, %s512
      %p514 = scmp.lt.s32.totalorder %s23, 1
      %s515 = scalar_select %p514, %s23, 1
      %p516 = scmp.lt.s32.totalorder %s24, 3
      %s517 = scalar_select %p516, %s24, 3
      %p518 = scmp.lt.s32.totalorder %s25, 1
      %s519 = scalar_select %p518, %s25, 1
      %s520 = smul.addr %s517, 2
      %s521 = sadd.s32 %s519, %s520
      %s522 = smul.addr %s515, 8
      %s523 = sadd.s32 %s521, %s522
      %s524 = smul.addr %s523, 8
      %s525 = scalar_lea.vmem %s5, %s524
      %p526 = scmp.lt.s32.totalorder %s23, 1
      %s527 = scalar_select %p526, %s23, 1
      %p528 = scmp.lt.s32.totalorder %s24, 3
      %s529 = scalar_select %p528, %s24, 3
      %p530 = scmp.lt.s32.totalorder %s25, 1
      %s531 = scalar_select %p530, %s25, 1
      %s532 = smul.addr %s529, 2
      %s533 = sadd.s32 %s531, %s532
      %s534 = smul.addr %s527, 8
      %s535 = sadd.s32 %s533, %s534
      %s536 = smul.addr %s535, 8
      %s537 = scalar_lea.vmem %s6, %s536
      // Predicated region
      $region37: #{tpu_custom_call.1} parent=35 // pred_check
        %p538 = pneg %p165
      $region38: #{tpu_custom_call.1} parent=35 // pred_check_branch
        %540 = sbr.rel (%p538) target = $region40
      $region39: #{tpu_custom_call.1} parent=35 // pred_region
        _
      $region40: #{tpu_custom_call.1} parent=35 // pred_fallthru
        _
      // Predicated region
      $region41: #{tpu_custom_call.1} parent=35 // pred_check
        %p541 = pneg %p195
      $region42: #{tpu_custom_call.1} parent=35 // pred_check_branch
        %543 = sbr.rel (%p541) target = $region44
      $region43: #{tpu_custom_call.1} parent=35 // pred_region
        _
      $region44: #{tpu_custom_call.1} parent=35 // pred_fallthru
        _
      // Predicated region
      $region45: #{tpu_custom_call.1} parent=35 // pred_check
        %p544 = pneg %p225
      $region46: #{tpu_custom_call.1} parent=35 // pred_check_branch
        %546 = sbr.rel (%p544) target = $region48
      $region47: #{tpu_custom_call.1} parent=35 // pred_region
        _
      $region48: #{tpu_custom_call.1} parent=35 // pred_fallthru
        _
    $region36: #{tpu_custom_call.1} parent=5 // pred_fallthru
      _
    %p547 = scmp.le.s32.totalorder 2, %s13
    // Predicated region
    $region49: #{tpu_custom_call.1} parent=5 // pred_check
      %p548 = pneg %p547
    $region50: #{tpu_custom_call.1} parent=5 // pred_check_branch
      %550 = sbr.rel (%p548) target = $region52
    $region51: #{tpu_custom_call.1} parent=5 // pred_region
      %s551 = ssub.s32 %s13, 2
      // Predicated region
      $region53: #{tpu_custom_call.1} parent=51 // pred_check
        %p552 = pneg %p171
      $region54: #{tpu_custom_call.1} parent=51 // pred_check_branch
        %554 = sbr.rel (%p552) target = $region56
      $region55: #{tpu_custom_call.1} parent=51 // pred_region
        %p555 = scmp.lt.s32.totalorder %s26, 1
        %s556 = scalar_select %p555, %s26, 1
        %p557 = scmp.lt.s32.totalorder %s27, 3
        %s558 = scalar_select %p557, %s27, 3
        %p559 = scmp.lt.s32.totalorder %s28, 1
        %s560 = scalar_select %p559, %s28, 1
        %s561 = smul.addr %s558, 2
        %s562 = sadd.s32 %s560, %s561
        %s563 = smul.addr %s556, 8
        %s564 = sadd.s32 %s562, %s563
        %s565 = smul.addr %s564, 8
        %s566 = scalar_lea.vmem %s4, %s565
      $region56: #{tpu_custom_call.1} parent=51 // pred_fallthru
        _
      // Predicated region
      $region57: #{tpu_custom_call.1} parent=51 // pred_check
        %p567 = pneg %p201
      $region58: #{tpu_custom_call.1} parent=51 // pred_check_branch
        %569 = sbr.rel (%p567) target = $region60
      $region59: #{tpu_custom_call.1} parent=51 // pred_region
        %p570 = scmp.lt.s32.totalorder %s26, 1
        %s571 = scalar_select %p570, %s26, 1
        %p572 = scmp.lt.s32.totalorder %s27, 3
        %s573 = scalar_select %p572, %s27, 3
        %p574 = scmp.lt.s32.totalorder %s28, 1
        %s575 = scalar_select %p574, %s28, 1
        %s576 = smul.addr %s573, 2
        %s577 = sadd.s32 %s575, %s576
        %s578 = smul.addr %s571, 8
        %s579 = sadd.s32 %s577, %s578
        %s580 = smul.addr %s579, 8
        %s581 = scalar_lea.vmem %s5, %s580
      $region60: #{tpu_custom_call.1} parent=51 // pred_fallthru
        _
      // Predicated region
      $region61: #{tpu_custom_call.1} parent=51 // pred_check
        %p582 = pneg %p231
      $region62: #{tpu_custom_call.1} parent=51 // pred_check_branch
        %584 = sbr.rel (%p582) target = $region64
      $region63: #{tpu_custom_call.1} parent=51 // pred_region
        %p585 = scmp.lt.s32.totalorder %s26, 1
        %s586 = scalar_select %p585, %s26, 1
        %p587 = scmp.lt.s32.totalorder %s27, 3
        %s588 = scalar_select %p587, %s27, 3
        %p589 = scmp.lt.s32.totalorder %s28, 1
        %s590 = scalar_select %p589, %s28, 1
        %s591 = smul.addr %s588, 2
        %s592 = sadd.s32 %s590, %s591
        %s593 = smul.addr %s586, 8
        %s594 = sadd.s32 %s592, %s593
        %s595 = smul.addr %s594, 8
        %s596 = scalar_lea.vmem %s6, %s595
      $region64: #{tpu_custom_call.1} parent=51 // pred_fallthru
        _
    $region52: #{tpu_custom_call.1} parent=5 // pred_fallthru
      _
  $region6: #{tpu_custom_call.1} parent=0 // loop_footer
    %s17 = sadd.s32 1, %s13
  $region7: #{tpu_custom_call.1} parent=0 // loop_footer_branch
    %12 = sbr.rel target = $region3
  $region8: #{tpu_custom_call.1} parent=0 // loop_exit
    _

// kernel: tpu_custom_call.1
$region0: #{tpu_custom_call.1}
  #allocation0 [shape = 'u32[]', space=smem, size = 0x4, offset = 0x4, fixed_abs, tag = 'smem constant byte address 0x4 - core index']
  #allocation1 [shape = 'u32[72,128]{1,0:T(1,128)}', space=vmem, size = 0x9000, scoped, tag = 'internal scratch']
  %s0 = inlined_call_operand.vmem [shape: f32[2,16,32], index: 0, kind: input, shape index: {}]
  %s1 = inlined_call_operand.vmem [shape: f32[4,32,8], index: 1, kind: input, shape index: {}]
  %s2 = inlined_call_operand.vmem [shape: f32[4,32,8], index: 2, kind: input, shape index: {}]
  %s3 = inlined_call_operand.vmem [shape: f32[4,32,8], index: 3, kind: input, shape index: {}]
  %s4 = inlined_call_operand.vmem [shape: f32[2,4,16,8], index: 4, kind: output, shape index: {0}]
  %s5 = inlined_call_operand.vmem [shape: f32[2,4,16,8], index: 5, kind: output, shape index: {1}]
  %s6 = inlined_call_operand.vmem [shape: f32[2,4,16,8], index: 6, kind: output, shape index: {2}]
  %7 = xla_tuple %s4, %s5, %s6
  %s8 = sld [smem:[#allocation0]]
  $region65: #{tpu_custom_call.1} parent=0
    _
  %s10 = ssub.s32 1, %s8
  %s11 = scalar_select 0, %s10, %s8
  loop: start=0, step=1, limit=18
  $region2: #{tpu_custom_call.1} parent=0 // loop_pre_header
    _
  $region3: #{tpu_custom_call.1} parent=0 // loop_header
    %s13 = sphi 0, %s17
    %p14 = scmp.ge.s32.totalorder %s13, 18
    %s20 = sphi 0, %s39
    %s21 = sphi 0, %s35
    %s22 = sphi 0, %s31
    %s23 = sphi 0, %s20
    %s24 = sphi 0, %s21
    %s25 = sphi 0, %s22
    %s26 = sphi 0, %s23
    %s27 = sphi 0, %s24
    %s28 = sphi 0, %s25
    %s44 = sphi 0, %s46
    %s47 = sphi 0, %s44
    %s48 = sphi 0, %s47
    %s64 = sphi 0, %s48
    %s70 = sphi 0, %s72
    %s73 = sphi 0, %s70
    %s74 = sphi 0, %s73
    %s90 = sphi 0, %s74
    %s96 = sphi 0, %s98
    %s99 = sphi 0, %s96
    %s100 = sphi 0, %s99
    %s116 = sphi 0, %s100
    %s122 = sphi 0, %s124
    %s125 = sphi 0, %s122
    %s126 = sphi 0, %s125
    %s142 = sphi 0, %s126
    %s152 = sphi 0, %s154
    %s155 = sphi 0, %s152
    %s156 = sphi 0, %s155
    %s172 = sphi 0, %s156
    %s182 = sphi 0, %s184
    %s185 = sphi 0, %s182
    %s186 = sphi 0, %s185
    %s202 = sphi 0, %s186
    %s212 = sphi 0, %s214
    %s215 = sphi 0, %s212
    %s216 = sphi 0, %s215
    %s232 = sphi 0, %s216
  $region4: #{tpu_custom_call.1} parent=0 // loop_header_branch
    %16 = sbr.rel (%p14) target = $region8
  $region5: #{tpu_custom_call.1} parent=0 // loop_body
    %s18 = ssub.s32 %s13, 1
    %s19 = ssub.s32 %s13, 2
    %s29 = sadd.s32 1, %s22
    %p30 = scmp.ge.s32.totalorder %s29, 2
    %s31 = scalar_select %p30, 0, %s29
    %s32 = sadd.s32 1, %s21
    %s33 = scalar_select %p30, %s32, %s21
    %p34 = scmp.ge.s32.totalorder %s33, 4
    %s35 = scalar_select %p34, 0, %s33
    %s36 = sadd.s32 1, %s20
    %s37 = scalar_select %p34, %s36, %s20
    %p38 = scmp.ge.s32.totalorder %s37, 2
    %s39 = scalar_select %p38, 0, %s37
    %s40 = ssub.s32 %s20, %s39
    %s41 = ssub.s32 %s22, %s31
    %s42 = sor.u32 %s40, %s41
    %p43 = scmp.eq.s32.totalorder %s42, 0
    %s45 = sadd.s32 %s44, 1
    %s46 = scalar_select %p43, %s44, %s45
    %p49 = pneg %p43
    %p50 = scmp.eq.s32.totalorder %s13, 15
    %p51 = por %p49, %p50
    %p52 = scmp.ne.s32.totalorder %s44, %s47
    %p53 = scmp.eq.s32.totalorder %s13, 0
    %p54 = por %p52, %p53
    %p55 = scmp.ne.s32.totalorder %s44, %s47
    %p56 = scmp.eq.s32.totalorder %s18, 15
    %p57 = por %p55, %p56
    %p58 = scmp.ne.s32.totalorder %s47, %s48
    %p59 = scmp.eq.s32.totalorder %s18, 0
    %p60 = por %p58, %p59
    %p61 = scmp.ne.s32.totalorder %s47, %s48
    %p62 = scmp.eq.s32.totalorder %s19, 15
    %p63 = por %p61, %p62
    %p65 = scmp.ne.s32.totalorder %s48, %s64
    %p66 = scmp.eq.s32.totalorder %s19, 0
    %p67 = por %p65, %p66
    %s68 = ssub.s32 %s21, %s35
    %p69 = scmp.eq.s32.totalorder %s68, 0
    %s71 = sadd.s32 %s70, 1
    %s72 = scalar_select %p69, %s70, %s71
    %p75 = pneg %p69
    %p76 = scmp.eq.s32.totalorder %s13, 15
    %p77 = por %p75, %p76
    %p78 = scmp.ne.s32.totalorder %s70, %s73
    %p79 = scmp.eq.s32.totalorder %s13, 0
    %p80 = por %p78, %p79
    %p81 = scmp.ne.s32.totalorder %s70, %s73
    %p82 = scmp.eq.s32.totalorder %s18, 15
    %p83 = por %p81, %p82
    %p84 = scmp.ne.s32.totalorder %s73, %s74
    %p85 = scmp.eq.s32.totalorder %s18, 0
    %p86 = por %p84, %p85
    %p87 = scmp.ne.s32.totalorder %s73, %s74
    %p88 = scmp.eq.s32.totalorder %s19, 15
    %p89 = por %p87, %p88
    %p91 = scmp.ne.s32.totalorder %s74, %s90
    %p92 = scmp.eq.s32.totalorder %s19, 0
    %p93 = por %p91, %p92
    %s94 = ssub.s32 %s21, %s35
    %p95 = scmp.eq.s32.totalorder %s94, 0
    %s97 = sadd.s32 %s96, 1
    %s98 = scalar_select %p95, %s96, %s97
    %p101 = pneg %p95
    %p102 = scmp.eq.s32.totalorder %s13, 15
    %p103 = por %p101, %p102
    %p104 = scmp.ne.s32.totalorder %s96, %s99
    %p105 = scmp.eq.s32.totalorder %s13, 0
    %p106 = por %p104, %p105
    %p107 = scmp.ne.s32.totalorder %s96, %s99
    %p108 = scmp.eq.s32.totalorder %s18, 15
    %p109 = por %p107, %p108
    %p110 = scmp.ne.s32.totalorder %s99, %s100
    %p111 = scmp.eq.s32.totalorder %s18, 0
    %p112 = por %p110, %p111
    %p113 = scmp.ne.s32.totalorder %s99, %s100
    %p114 = scmp.eq.s32.totalorder %s19, 15
    %p115 = por %p113, %p114
    %p117 = scmp.ne.s32.totalorder %s100, %s116
    %p118 = scmp.eq.s32.totalorder %s19, 0
    %p119 = por %p117, %p118
    %s120 = ssub.s32 %s21, %s35
    %p121 = scmp.eq.s32.totalorder %s120, 0
    %s123 = sadd.s32 %s122, 1
    %s124 = scalar_select %p121, %s122, %s123
    %p127 = pneg %p121
    %p128 = scmp.eq.s32.totalorder %s13, 15
    %p129 = por %p127, %p128
    %p130 = scmp.ne.s32.totalorder %s122, %s125
    %p131 = scmp.eq.s32.totalorder %s13, 0
    %p132 = por %p130, %p131
    %p133 = scmp.ne.s32.totalorder %s122, %s125
    %p134 = scmp.eq.s32.totalorder %s18, 15
    %p135 = por %p133, %p134
    %p136 = scmp.ne.s32.totalorder %s125, %s126
    %p137 = scmp.eq.s32.totalorder %s18, 0
    %p138 = por %p136, %p137
    %p139 = scmp.ne.s32.totalorder %s125, %s126
    %p140 = scmp.eq.s32.totalorder %s19, 15
    %p141 = por %p139, %p140
    %p143 = scmp.ne.s32.totalorder %s126, %s142
    %p144 = scmp.eq.s32.totalorder %s19, 0
    %p145 = por %p143, %p144
    %s146 = ssub.s32 %s20, %s39
    %s147 = ssub.s32 %s21, %s35
    %s148 = sor.u32 %s146, %s147
    %s149 = ssub.s32 %s22, %s31
    %s150 = sor.u32 %s148, %s149
    %p151 = scmp.eq.s32.totalorder %s150, 0
    %s153 = sadd.s32 %s152, 1
    %s154 = scalar_select %p151, %s152, %s153
    %p157 = pneg %p151
    %p158 = scmp.eq.s32.totalorder %s13, 15
    %p159 = por %p157, %p158
    %p160 = scmp.ne.s32.totalorder %s152, %s155
    %p161 = scmp.eq.s32.totalorder %s13, 0
    %p162 = por %p160, %p161
    %p163 = scmp.ne.s32.totalorder %s152, %s155
    %p164 = scmp.eq.s32.totalorder %s18, 15
    %p165 = por %p163, %p164
    %p166 = scmp.ne.s32.totalorder %s155, %s156
    %p167 = scmp.eq.s32.totalorder %s18, 0
    %p168 = por %p166, %p167
    %p169 = scmp.ne.s32.totalorder %s155, %s156
    %p170 = scmp.eq.s32.totalorder %s19, 15
    %p171 = por %p169, %p170
    %p173 = scmp.ne.s32.totalorder %s156, %s172
    %p174 = scmp.eq.s32.totalorder %s19, 0
    %p175 = por %p173, %p174
    %s176 = ssub.s32 %s20, %s39
    %s177 = ssub.s32 %s21, %s35
    %s178 = sor.u32 %s176, %s177
    %s179 = ssub.s32 %s22, %s31
    %s180 = sor.u32 %s178, %s179
    %p181 = scmp.eq.s32.totalorder %s180, 0
    %s183 = sadd.s32 %s182, 1
    %s184 = scalar_select %p181, %s182, %s183
    %p187 = pneg %p181
    %p188 = scmp.eq.s32.totalorder %s13, 15
    %p189 = por %p187, %p188
    %p190 = scmp.ne.s32.totalorder %s182, %s185
    %p191 = scmp.eq.s32.totalorder %s13, 0
    %p192 = por %p190, %p191
    %p193 = scmp.ne.s32.totalorder %s182, %s185
    %p194 = scmp.eq.s32.totalorder %s18, 15
    %p195 = por %p193, %p194
    %p196 = scmp.ne.s32.totalorder %s185, %s186
    %p197 = scmp.eq.s32.totalorder %s18, 0
    %p198 = por %p196, %p197
    %p199 = scmp.ne.s32.totalorder %s185, %s186
    %p200 = scmp.eq.s32.totalorder %s19, 15
    %p201 = por %p199, %p200
    %p203 = scmp.ne.s32.totalorder %s186, %s202
    %p204 = scmp.eq.s32.totalorder %s19, 0
    %p205 = por %p203, %p204
    %s206 = ssub.s32 %s20, %s39
    %s207 = ssub.s32 %s21, %s35
    %s208 = sor.u32 %s206, %s207
    %s209 = ssub.s32 %s22, %s31
    %s210 = sor.u32 %s208, %s209
    %p211 = scmp.eq.s32.totalorder %s210, 0
    %s213 = sadd.s32 %s212, 1
    %s214 = scalar_select %p211, %s212, %s213
    %p217 = pneg %p211
    %p218 = scmp.eq.s32.totalorder %s13, 15
    %p219 = por %p217, %p218
    %p220 = scmp.ne.s32.totalorder %s212, %s215
    %p221 = scmp.eq.s32.totalorder %s13, 0
    %p222 = por %p220, %p221
    %p223 = scmp.ne.s32.totalorder %s212, %s215
    %p224 = scmp.eq.s32.totalorder %s18, 15
    %p225 = por %p223, %p224
    %p226 = scmp.ne.s32.totalorder %s215, %s216
    %p227 = scmp.eq.s32.totalorder %s18, 0
    %p228 = por %p226, %p227
    %p229 = scmp.ne.s32.totalorder %s215, %s216
    %p230 = scmp.eq.s32.totalorder %s19, 15
    %p231 = por %p229, %p230
    %p233 = scmp.ne.s32.totalorder %s216, %s232
    %p234 = scmp.eq.s32.totalorder %s19, 0
    %p235 = por %p233, %p234
    %p236 = scmp.le.s32.totalorder 1, %s13
    %p237 = scmp.lt.s32.totalorder %s13, 17
    %p238 = pnand %p236, %p237
    %p239 = pneg %p238
    // Predicated region
    $region9: #{tpu_custom_call.1} parent=5 // pred_check
      _
    $region10: #{tpu_custom_call.1} parent=5 // pred_check_branch
      %241 = sbr.rel (%p238) target = $region12
    $region11: #{tpu_custom_call.1} parent=5 // pred_region
      %s242 = ssub.s32 %s13, 1
    $region12: #{tpu_custom_call.1} parent=5 // pred_fallthru
      _
    %p243 = scmp.lt.s32.totalorder %s13, 16
    // Predicated region
    $region13: #{tpu_custom_call.1} parent=5 // pred_check
      %p244 = pneg %p243
    $region14: #{tpu_custom_call.1} parent=5 // pred_check_branch
      %246 = sbr.rel (%p244) target = $region16
    $region15: #{tpu_custom_call.1} parent=5 // pred_region
      // Predicated region
      $region17: #{tpu_custom_call.1} parent=15 // pred_check
        %p247 = pneg %p54
      $region18: #{tpu_custom_call.1} parent=15 // pred_check_branch
        %249 = sbr.rel (%p247) target = $region20
      $region19: #{tpu_custom_call.1} parent=15 // pred_region
        %p250 = scmp.lt.s32.totalorder %s20, 1
        %s251 = scalar_select %p250, %s20, 1
        %p252 = scmp.lt.s32.totalorder %s22, 1
        %s253 = scalar_select %p252, %s22, 1
        %s254 = smul.addr %s251, 2
        %s255 = sadd.s32 %s253, %s254
        %s256 = smul.addr %s255, 8
        %s257 = scalar_lea.vmem %s0, %s256
      $region20: #{tpu_custom_call.1} parent=15 // pred_fallthru
        _
      // Predicated region
      $region21: #{tpu_custom_call.1} parent=15 // pred_check
        %p258 = pneg %p80
      $region22: #{tpu_custom_call.1} parent=15 // pred_check_branch
        %260 = sbr.rel (%p258) target = $region24
      $region23: #{tpu_custom_call.1} parent=15 // pred_region
        %p261 = scmp.lt.s32.totalorder %s21, 3
        %s262 = scalar_select %p261, %s21, 3
        %s263 = smul.addr %s262, 4
        %s264 = smul.addr %s263, 8
        %s265 = scalar_lea.vmem %s1, %s264
      $region24: #{tpu_custom_call.1} parent=15 // pred_fallthru
        _
      // Predicated region
      $region25: #{tpu_custom_call.1} parent=15 // pred_check
        %p266 = pneg %p106
      $region26: #{tpu_custom_call.1} parent=15 // pred_check_branch
        %268 = sbr.rel (%p266) target = $region28
      $region27: #{tpu_custom_call.1} parent=15 // pred_region
        %p269 = scmp.lt.s32.totalorder %s21, 3
        %s270 = scalar_select %p269, %s21, 3
        %s271 = smul.addr %s270, 4
        %s272 = smul.addr %s271, 8
        %s273 = scalar_lea.vmem %s2, %s272
      $region28: #{tpu_custom_call.1} parent=15 // pred_fallthru
        _
      // Predicated region
      $region29: #{tpu_custom_call.1} parent=15 // pred_check
        %p274 = pneg %p132
      $region30: #{tpu_custom_call.1} parent=15 // pred_check_branch
        %276 = sbr.rel (%p274) target = $region32
      $region31: #{tpu_custom_call.1} parent=15 // pred_region
        %p277 = scmp.lt.s32.totalorder %s21, 3
        %s278 = scalar_select %p277, %s21, 3
        %s279 = smul.addr %s278, 4
        %s280 = smul.addr %s279, 8
        %s281 = scalar_lea.vmem %s3, %s280
      $region32: #{tpu_custom_call.1} parent=15 // pred_fallthru
        _
    $region16: #{tpu_custom_call.1} parent=5 // pred_fallthru
      _
    %p282 = scmp.le.s32.totalorder 1, %s13
    %p283 = scmp.lt.s32.totalorder %s13, 17
    %p284 = pnand %p282, %p283
    %p285 = pneg %p284
    // Predicated region
    $region33: #{tpu_custom_call.1} parent=5 // pred_check
      _
    $region34: #{tpu_custom_call.1} parent=5 // pred_check_branch
      %287 = sbr.rel (%p284) target = $region36
    $region35: #{tpu_custom_call.1} parent=5 // pred_region
      %s288 = ssub.s32 %s13, 1
      %p289 = scmp.lt.s32.totalorder %s23, 1
      %s290 = scalar_select %p289, %s23, 1
      %p291 = scmp.lt.s32.totalorder %s25, 1
      %s292 = scalar_select %p291, %s25, 1
      %s293 = smul.addr %s290, 2
      %s294 = sadd.s32 %s292, %s293
      %s295 = smul.addr %s294, 8
      %s296 = scalar_lea.vmem %s0, %s295
      %p297 = pneg %p60
      %p298 = pneg %p57
      %p299 = scmp.lt.s32.totalorder %s24, 3
      %s300 = scalar_select %p299, %s24, 3
      %s301 = smul.addr %s300, 4
      %s302 = smul.addr %s301, 8
      %s303 = scalar_lea.vmem %s1, %s302
      %p304 = pneg %p86
      %p305 = pneg %p83
      %p306 = scmp.lt.s32.totalorder %s24, 3
      %s307 = scalar_select %p306, %s24, 3
      %s308 = smul.addr %s307, 4
      %s309 = smul.addr %s308, 8
      %s310 = scalar_lea.vmem %s2, %s309
      %p311 = pneg %p112
      %p312 = pneg %p109
      %p313 = scmp.lt.s32.totalorder %s24, 3
      %s314 = scalar_select %p313, %s24, 3
      %s315 = smul.addr %s314, 4
      %s316 = smul.addr %s315, 8
      %s317 = scalar_lea.vmem %s3, %s316
      %p318 = pneg %p138
      %p319 = pneg %p135
      %p320 = pneg %p168
      %p321 = pneg %p165
      %p322 = scmp.lt.s32.totalorder %s23, 1
      %s323 = scalar_select %p322, %s23, 1
      %p324 = scmp.lt.s32.totalorder %s24, 3
      %s325 = scalar_select %p324, %s24, 3
      %p326 = scmp.lt.s32.totalorder %s25, 1
      %s327 = scalar_select %p326, %s25, 1
      %s328 = smul.addr %s325, 2
      %s329 = sadd.s32 %s327, %s328
      %s330 = smul.addr %s323, 8
      %s331 = sadd.s32 %s329, %s330
      %s332 = smul.addr %s331, 8
      %s333 = scalar_lea.vmem %s4, %s332
      %p334 = pneg %p198
      %p335 = pneg %p195
      %p336 = scmp.lt.s32.totalorder %s23, 1
      %s337 = scalar_select %p336, %s23, 1
      %p338 = scmp.lt.s32.totalorder %s24, 3
      %s339 = scalar_select %p338, %s24, 3
      %p340 = scmp.lt.s32.totalorder %s25, 1
      %s341 = scalar_select %p340, %s25, 1
      %s342 = smul.addr %s339, 2
      %s343 = sadd.s32 %s341, %s342
      %s344 = smul.addr %s337, 8
      %s345 = sadd.s32 %s343, %s344
      %s346 = smul.addr %s345, 8
      %s347 = scalar_lea.vmem %s5, %s346
      %p348 = pneg %p228
      %p349 = pneg %p225
      %p350 = scmp.lt.s32.totalorder %s23, 1
      %s351 = scalar_select %p350, %s23, 1
      %p352 = scmp.lt.s32.totalorder %s24, 3
      %s353 = scalar_select %p352, %s24, 3
      %p354 = scmp.lt.s32.totalorder %s25, 1
      %s355 = scalar_select %p354, %s25, 1
      %s356 = smul.addr %s353, 2
      %s357 = sadd.s32 %s355, %s356
      %s358 = smul.addr %s351, 8
      %s359 = sadd.s32 %s357, %s358
      %s360 = smul.addr %s359, 8
      %s361 = scalar_lea.vmem %s6, %s360
      %p362 = scmp.lt.s32.totalorder %s23, 1
      %s363 = scalar_select %p362, %s23, 1
      %p364 = scmp.lt.s32.totalorder %s25, 1
      %s365 = scalar_select %p364, %s25, 1
      %s366 = smul.addr %s363, 2
      %s367 = sadd.s32 %s365, %s366
      %s368 = smul.addr %s367, 8
      %s369 = scalar_lea.vmem %s0, %s368
      %p370 = scmp.lt.s32.totalorder %s24, 3
      %s371 = scalar_select %p370, %s24, 3
      %s372 = smul.addr %s371, 4
      %s373 = smul.addr %s372, 8
      %s374 = scalar_lea.vmem %s1, %s373
      %p375 = scmp.lt.s32.totalorder %s24, 3
      %s376 = scalar_select %p375, %s24, 3
      %s377 = smul.addr %s376, 4
      %s378 = smul.addr %s377, 8
      %s379 = scalar_lea.vmem %s2, %s378
      %p380 = scmp.lt.s32.totalorder %s24, 3
      %s381 = scalar_select %p380, %s24, 3
      %s382 = smul.addr %s381, 4
      %s383 = smul.addr %s382, 8
      %s384 = scalar_lea.vmem %s3, %s383
      %p385 = scmp.lt.s32.totalorder %s23, 1
      %s386 = scalar_select %p385, %s23, 1
      %p387 = scmp.lt.s32.totalorder %s24, 3
      %s388 = scalar_select %p387, %s24, 3
      %p389 = scmp.lt.s32.totalorder %s25, 1
      %s390 = scalar_select %p389, %s25, 1
      %s391 = smul.addr %s388, 2
      %s392 = sadd.s32 %s390, %s391
      %s393 = smul.addr %s386, 8
      %s394 = sadd.s32 %s392, %s393
      %s395 = smul.addr %s394, 8
      %s396 = scalar_lea.vmem %s4, %s395
      %p397 = scmp.lt.s32.totalorder %s23, 1
      %s398 = scalar_select %p397, %s23, 1
      %p399 = scmp.lt.s32.totalorder %s24, 3
      %s400 = scalar_select %p399, %s24, 3
      %p401 = scmp.lt.s32.totalorder %s25, 1
      %s402 = scalar_select %p401, %s25, 1
      %s403 = smul.addr %s400, 2
      %s404 = sadd.s32 %s402, %s403
      %s405 = smul.addr %s398, 8
      %s406 = sadd.s32 %s404, %s405
      %s407 = smul.addr %s406, 8
      %s408 = scalar_lea.vmem %s5, %s407
      %p409 = scmp.lt.s32.totalorder %s23, 1
      %s410 = scalar_select %p409, %s23, 1
      %p411 = scmp.lt.s32.totalorder %s24, 3
      %s412 = scalar_select %p411, %s24, 3
      %p413 = scmp.lt.s32.totalorder %s25, 1
      %s414 = scalar_select %p413, %s25, 1
      %s415 = smul.addr %s412, 2
      %s416 = sadd.s32 %s414, %s415
      %s417 = smul.addr %s410, 8
      %s418 = sadd.s32 %s416, %s417
      %s419 = smul.addr %s418, 8
      %s420 = scalar_lea.vmem %s6, %s419
      %v421 = vld [vmem:[%s369] sm:$0xff]
      %v422 = vld [vmem:[%s374] sm:$0xff]
      %v423 = vld [vmem:[%s374 + $0x8] sm:$0xff]
      %v424 = vld [vmem:[%s374 + $0x10] sm:$0xff]
      %v425 = vld [vmem:[%s374 + $0x18] sm:$0xff]
      %vm426 = vcmask 261120
      %v428 = vsel %vm426, %v421, 0
      %430 = vmatpush.msra.mxu0 0.0
      %431 = vmatpush.msra.mxu0 0.0
      %432 = vmatpush.msra.mxu0 0.0
      %433 = vmatpush.msra.mxu0 0.0
      %434 = vmatpush.msra.mxu0 0.0
      %435 = vmatpush.msra.mxu0 0.0
      %436 = vmatpush.msra.mxu0 0.0
      %437 = vmatpush.msra.mxu0 0.0
      %438 = vmatpush.msra.mxu0 0.0
      %439 = vmatpush.msra.mxu0 0.0
      %440 = vmatpush.msra.mxu0 0.0
      %441 = vmatpush.msra.mxu0 0.0
      %442 = vmatpush.msra.mxu0 %v425
      %443 = vmatpush.msra.mxu0 %v424
      %444 = vmatpush.msra.mxu0 %v423
      %445 = vmatpush.msra.mxu0 %v422
      %446 = vmatmul.f32.gmra.mxu0 %v428
      %v447 = vpop.f32.mrf.mxu0
      %v448 = vadd.f32 0.0, %v447
      %449 = vdwg.mxu0
      %v450 = vld [vmem:[%s379] sm:$0xff]
      %v451 = vld [vmem:[%s379 + $0x8] sm:$0xff]
      %v452 = vld [vmem:[%s379 + $0x10] sm:$0xff]
      %v453 = vld [vmem:[%s379 + $0x18] sm:$0xff]
      %454 = vmatpush.msra.mxu0 0.0
      %455 = vmatpush.msra.mxu0 0.0
      %456 = vmatpush.msra.mxu0 0.0
      %457 = vmatpush.msra.mxu0 0.0
      %458 = vmatpush.msra.mxu0 0.0
      %459 = vmatpush.msra.mxu0 0.0
      %460 = vmatpush.msra.mxu0 0.0
      %461 = vmatpush.msra.mxu0 0.0
      %462 = vmatpush.msra.mxu0 0.0
      %463 = vmatpush.msra.mxu0 0.0
      %464 = vmatpush.msra.mxu0 0.0
      %465 = vmatpush.msra.mxu0 0.0
      %466 = vmatpush.msra.mxu0 %v453
      %467 = vmatpush.msra.mxu0 %v452
      %468 = vmatpush.msra.mxu0 %v451
      %469 = vmatpush.msra.mxu0 %v450
      %470 = vmatmul.f32.gmra.mxu0 %v428
      %v471 = vpop.f32.mrf.mxu0
      %v472 = vadd.f32 0.0, %v471
      %473 = vdwg.mxu0
      %v474 = vld [vmem:[%s384] sm:$0xff]
      %v475 = vld [vmem:[%s384 + $0x8] sm:$0xff]
      %v476 = vld [vmem:[%s384 + $0x10] sm:$0xff]
      %v477 = vld [vmem:[%s384 + $0x18] sm:$0xff]
      %478 = vmatpush.msra.mxu0 0.0
      %479 = vmatpush.msra.mxu0 0.0
      %480 = vmatpush.msra.mxu0 0.0
      %481 = vmatpush.msra.mxu0 0.0
      %482 = vmatpush.msra.mxu0 0.0
      %483 = vmatpush.msra.mxu0 0.0
      %484 = vmatpush.msra.mxu0 0.0
      %485 = vmatpush.msra.mxu0 0.0
      %486 = vmatpush.msra.mxu0 0.0
      %487 = vmatpush.msra.mxu0 0.0
      %488 = vmatpush.msra.mxu0 0.0
      %489 = vmatpush.msra.mxu0 0.0
      %490 = vmatpush.msra.mxu0 %v477
      %491 = vmatpush.msra.mxu0 %v476
      %492 = vmatpush.msra.mxu0 %v475
      %493 = vmatpush.msra.mxu0 %v474
      %494 = vmatmul.f32.gmra.mxu0 %v428
      %v495 = vpop.f32.mrf.mxu0
      %v496 = vadd.f32 0.0, %v495
      %497 = vdwg.mxu0
      %vm498 = vcmask 64512
      %499 = vst.msk [vmem:[%s396] sm:$0xff] %vm498, %v448
      %500 = vst.msk [vmem:[%s408] sm:$0xff] %vm498, %v472
      %501 = vst.msk [vmem:[%s420] sm:$0xff] %vm498, %v496
      %p502 = scmp.lt.s32.totalorder %s23, 1
      %s503 = scalar_select %p502, %s23, 1
      %p504 = scmp.lt.s32.totalorder %s24, 3
      %s505 = scalar_select %p504, %s24, 3
      %p506 = scmp.lt.s32.totalorder %s25, 1
      %s507 = scalar_select %p506, %s25, 1
      %s508 = smul.addr %s505, 2
      %s509 = sadd.s32 %s507, %s508
      %s510 = smul.addr %s503, 8
      %s511 = sadd.s32 %s509, %s510
      %s512 = smul.addr %s511, 8
      %s513 = scalar_lea.vmem %s4, %s512
      %p514 = scmp.lt.s32.totalorder %s23, 1
      %s515 = scalar_select %p514, %s23, 1
      %p516 = scmp.lt.s32.totalorder %s24, 3
      %s517 = scalar_select %p516, %s24, 3
      %p518 = scmp.lt.s32.totalorder %s25, 1
      %s519 = scalar_select %p518, %s25, 1
      %s520 = smul.addr %s517, 2
      %s521 = sadd.s32 %s519, %s520
      %s522 = smul.addr %s515, 8
      %s523 = sadd.s32 %s521, %s522
      %s524 = smul.addr %s523, 8
      %s525 = scalar_lea.vmem %s5, %s524
      %p526 = scmp.lt.s32.totalorder %s23, 1
      %s527 = scalar_select %p526, %s23, 1
      %p528 = scmp.lt.s32.totalorder %s24, 3
      %s529 = scalar_select %p528, %s24, 3
      %p530 = scmp.lt.s32.totalorder %s25, 1
      %s531 = scalar_select %p530, %s25, 1
      %s532 = smul.addr %s529, 2
      %s533 = sadd.s32 %s531, %s532
      %s534 = smul.addr %s527, 8
      %s535 = sadd.s32 %s533, %s534
      %s536 = smul.addr %s535, 8
      %s537 = scalar_lea.vmem %s6, %s536
      // Predicated region
      $region37: #{tpu_custom_call.1} parent=35 // pred_check
        %p538 = pneg %p165
      $region38: #{tpu_custom_call.1} parent=35 // pred_check_branch
        %540 = sbr.rel (%p538) target = $region40
      $region39: #{tpu_custom_call.1} parent=35 // pred_region
        _
      $region40: #{tpu_custom_call.1} parent=35 // pred_fallthru
        _
      // Predicated region
      $region41: #{tpu_custom_call.1} parent=35 // pred_check
        %p541 = pneg %p195
      $region42: #{tpu_custom_call.1} parent=35 // pred_check_branch
        %543 = sbr.rel (%p541) target = $region44
      $region43: #{tpu_custom_call.1} parent=35 // pred_region
        _
      $region44: #{tpu_custom_call.1} parent=35 // pred_fallthru
        _
      // Predicated region
      $region45: #{tpu_custom_call.1} parent=35 // pred_check
        %p544 = pneg %p225
      $region46: #{tpu_custom_call.1} parent=35 // pred_check_branch
        %546 = sbr.rel (%p544) target = $region48
      $region47: #{tpu_custom_call.1} parent=35 // pred_region
        _
      $region48: #{tpu_custom_call.1} parent=35 // pred_fallthru
        _
    $region36: #{tpu_custom_call.1} parent=5 // pred_fallthru
      _
    %p547 = scmp.le.s32.totalorder 2, %s13
    // Predicated region
    $region49: #{tpu_custom_call.1} parent=5 // pred_check
      %p548 = pneg %p547
    $region50: #{tpu_custom_call.1} parent=5 // pred_check_branch
      %550 = sbr.rel (%p548) target = $region52
    $region51: #{tpu_custom_call.1} parent=5 // pred_region
      %s551 = ssub.s32 %s13, 2
      // Predicated region
      $region53: #{tpu_custom_call.1} parent=51 // pred_check
        %p552 = pneg %p171
      $region54: #{tpu_custom_call.1} parent=51 // pred_check_branch
        %554 = sbr.rel (%p552) target = $region56
      $region55: #{tpu_custom_call.1} parent=51 // pred_region
        %p555 = scmp.lt.s32.totalorder %s26, 1
        %s556 = scalar_select %p555, %s26, 1
        %p557 = scmp.lt.s32.totalorder %s27, 3
        %s558 = scalar_select %p557, %s27, 3
        %p559 = scmp.lt.s32.totalorder %s28, 1
        %s560 = scalar_select %p559, %s28, 1
        %s561 = smul.addr %s558, 2
        %s562 = sadd.s32 %s560, %s561
        %s563 = smul.addr %s556, 8
        %s564 = sadd.s32 %s562, %s563
        %s565 = smul.addr %s564, 8
        %s566 = scalar_lea.vmem %s4, %s565
      $region56: #{tpu_custom_call.1} parent=51 // pred_fallthru
        _
      // Predicated region
      $region57: #{tpu_custom_call.1} parent=51 // pred_check
        %p567 = pneg %p201
      $region58: #{tpu_custom_call.1} parent=51 // pred_check_branch
        %569 = sbr.rel (%p567) target = $region60
      $region59: #{tpu_custom_call.1} parent=51 // pred_region
        %p570 = scmp.lt.s32.totalorder %s26, 1
        %s571 = scalar_select %p570, %s26, 1
        %p572 = scmp.lt.s32.totalorder %s27, 3
        %s573 = scalar_select %p572, %s27, 3
        %p574 = scmp.lt.s32.totalorder %s28, 1
        %s575 = scalar_select %p574, %s28, 1
        %s576 = smul.addr %s573, 2
        %s577 = sadd.s32 %s575, %s576
        %s578 = smul.addr %s571, 8
        %s579 = sadd.s32 %s577, %s578
        %s580 = smul.addr %s579, 8
        %s581 = scalar_lea.vmem %s5, %s580
      $region60: #{tpu_custom_call.1} parent=51 // pred_fallthru
        _
      // Predicated region
      $region61: #{tpu_custom_call.1} parent=51 // pred_check
        %p582 = pneg %p231
      $region62: #{tpu_custom_call.1} parent=51 // pred_check_branch
        %584 = sbr.rel (%p582) target = $region64
      $region63: #{tpu_custom_call.1} parent=51 // pred_region
        %p585 = scmp.lt.s32.totalorder %s26, 1
        %s586 = scalar_select %p585, %s26, 1
        %p587 = scmp.lt.s32.totalorder %s27, 3
        %s588 = scalar_select %p587, %s27, 3
        %p589 = scmp.lt.s32.totalorder %s28, 1
        %s590 = scalar_select %p589, %s28, 1
        %s591 = smul.addr %s588, 2
        %s592 = sadd.s32 %s590, %s591
        %s593 = smul.addr %s586, 8
        %s594 = sadd.s32 %s592, %s593
        %s595 = smul.addr %s594, 8
        %s596 = scalar_lea.vmem %s6, %s595
      $region64: #{tpu_custom_call.1} parent=51 // pred_fallthru
        _
    $region52: #{tpu_custom_call.1} parent=5 // pred_fallthru
      _
  $region6: #{tpu_custom_call.1} parent=0 // loop_footer
    %s17 = sadd.s32 1, %s13
  $region7: #{tpu_custom_call.1} parent=0 // loop_footer_branch
    %12 = sbr.rel target = $region3
  $region8: #{tpu_custom_call.1} parent=0 // loop_exit
    _

</llo_original>
